<compile_context>
chip_gen: v6e
topology: v6e:2x2x1
jax: 0.10.0
libtpu: 0.0.40
codegen_flags: <defaults>
</compile_context>

<pallas_src>
import functools

import jax
import jax.numpy as jnp
from jax.experimental import pallas as pl
from jax.experimental.pallas import tpu as pltpu


def drm_kernel(inp_ref, gm_ref, pb_ref,
               w1_ref, w2_ref, wsca_ref, w3_ref, w4_ref, w5_ref,
               out_ref, *, H, W, eps, fuse_halves):
    C = wsca_ref.shape[0]
    L = inp_ref.shape[-1]            # lane-padded (H+1)*(W+1), multiple of 128
    Wp = W + 1
    Nf = float(C * H * W)            # LayerNorm2d element count (real pixels only)
    inv_hw = 1.0 / float(H * W)

    x_in = inp_ref[0]                                   # (C, L), guards are zero
    gmb = jnp.broadcast_to(gm_ref[...], (C, L))         # guard mask, hoisted broadcast
    pb = pb_ref[...]                                    # (2C, 10) packed bias/affine
    w2 = w2_ref[...]                                    # (2C, 9) depthwise taps (f32)

    g1, b1n = pb[:C, 0:1], pb[:C, 1:2]
    bc1, bc2 = pb[:, 2:3], pb[:, 3:4]
    bsca, bc3 = pb[:C, 4:5], pb[:C, 5:6]
    g2, b2n = pb[:C, 6:7], pb[:C, 7:8]
    bc4, bc5 = pb[:, 8:9], pb[:C, 9:10]

    def layernorm(x, g, b):
        # Two-pass: mean, then masked centered second moment.  Avoids the
        # catastrophic cancellation of the single-pass E[x^2]-mean^2 form and
        # keeps guard lanes out of the statistics.  Input guards must be zero.
        s1 = jnp.sum(x, keepdims=True)                  # (1, 1)
        mean = s1 * (1.0 / Nf)
        d = (x - mean) * gmb                            # deviations, guards zeroed
        var = jnp.sum(d * d, keepdims=True) * (1.0 / (Nf - 1.0))   # unbiased (torch .std)
        inv = 1.0 / (jnp.sqrt(var) + eps)               # torch adds eps to std
        return d * (g * inv) + b

    def dot(w_bf16, x_bf16):
        # MXU matmul: bf16 operands, f32 accumulation.
        return jnp.dot(w_bf16, x_bf16, preferred_element_type=jnp.float32)

    def conv1x1_vec(w, b, v):
        # (C, C) @ (C, 1): keep off the MXU (one useful lane + MRF pop latency
        # on v5e/v6e) -- unrolled VPU FMA chain over the tiny column instead.
        acc = b
        for i in range(v.shape[0]):
            acc = acc + w[:, i:i + 1] * v[i:i + 1, :]
        return acc

    def dwconv3x3(x, w, b):
        # Depthwise 3x3, zero padding 1.  x has zero guard row/column/lane-pad
        # so the 8 shifted taps are pure lane rolls (XLU slot) -- no per-tap
        # boundary masks and no in-kernel integer div/mod.
        acc = x * w[:, 4:5] + b                          # center tap
        k = 0
        for dh in (-1, 0, 1):
            for dw in (-1, 0, 1):
                if dh == 0 and dw == 0:
                    k += 1
                    continue
                s = dh * Wp + dw                         # want tap[p] = x[p + s]
                acc = acc + pltpu.roll(x, (-s) % L, 1) * w[:, k:k + 1]
                k += 1
        return acc

    # ---- branch 1: norm1 -> conv1 -> dw3x3 -> SimpleGate -> SCA -> conv3 ----
    xn = layernorm(x_in, g1, b1n)
    xnb = xn.astype(jnp.bfloat16)                        # cast once, reused by both dots
    if fuse_halves:
        # one (2C,C)@(C,L) MXU push; sublane split is tile-aligned (C % 8 == 0)
        c1 = dot(w1_ref[...], xnb) + bc1
        c1a = c1[:C] * gmb                               # zero guards: dwconv input
        c1b = c1[C:] * gmb
    else:
        w1 = w1_ref[...]
        c1a = (dot(w1[:C], xnb) + bc1[:C]) * gmb
        c1b = (dot(w1[C:], xnb) + bc1[C:]) * gmb
    xa = dwconv3x3(c1a, w2[:C], bc2[:C])
    xb = dwconv3x3(c1b, w2[C:], bc2[C:])
    xg = xa * xb * gmb                                   # SimpleGate; guards zeroed for pool

    pooled = jnp.sum(xg, axis=1, keepdims=True) * inv_hw          # (C, 1) lane reduce
    xs = xg * conv1x1_vec(wsca_ref[...], bsca, pooled)            # SCA channel scale

    # conv3 with residual beta folded on host; dropout1 is identity (rate = 0).
    # Mask y so norm2 statistics ignore the guard lanes.
    y = (x_in + dot(w3_ref[...], xs.astype(jnp.bfloat16)) + bc3) * gmb

    # ---- branch 2 (FFN): norm2 -> conv4 -> SimpleGate -> conv5 ----
    tn = layernorm(y, g2, b2n)
    tnb = tn.astype(jnp.bfloat16)
    if fuse_halves:
        c4 = dot(w4_ref[...], tnb) + bc4
        t = c4[:C] * c4[C:]
    else:
        w4 = w4_ref[...]
        t = (dot(w4[:C], tnb) + bc4[:C]) * (dot(w4[C:], tnb) + bc4[C:])
    # conv5 with residual gamma folded; dropout2 is identity.  Guard lanes of
    # the output are garbage and are stripped by the wrapper.
    out_ref[0] = y + dot(w5_ref[...], t.astype(jnp.bfloat16)) + bc5


def drm_forward(inp_nchw, p):
    """inp_nchw: (B, C, H, W) float32.  Returns (B, C, H, W) float32."""
    B, C, H, W = inp_nchw.shape
    Hp, Wp = H + 1, W + 1
    HWp = Hp * Wp
    L = ((HWp + 127) // 128) * 128                       # lane-dense padded length

    x = inp_nchw.astype(jnp.float32)
    # One zero guard row (top) + one zero guard column (right), flattened
    # row-major, then trailing zero pad up to a multiple of 128 lanes.  With
    # this layout every 3x3 tap is a pure lane roll that pulls genuine zeros
    # at all image borders (no per-tap boundary masks in the kernel).
    xp = jnp.pad(x, ((0, 0), (0, 0), (1, 0), (0, 1))).reshape(B, C, HWp)
    xf = jnp.pad(xp, ((0, 0), (0, 0), (0, L - HWp)))

    idx = jnp.arange(L, dtype=jnp.int32)
    gm = (((idx < HWp) & (idx // Wp >= 1) & (idx % Wp < W))
          .astype(jnp.float32).reshape(1, L))            # 1 on real pixels, 0 on guards

    betap = p["betap"].astype(jnp.float32)
    gammap = p["gammap"].astype(jnp.float32)
    vec = lambda v: v.reshape(-1).astype(jnp.float32)

    # Pack the 10 small bias/affine vectors into one (2C, 10) constant
    # (C-length vectors occupy rows [:C]); residual beta/gamma folded in.
    C2 = 2 * C
    pb = jnp.zeros((C2, 10), jnp.float32)
    cols = [vec(p["g1"]), vec(p["b1n"]), vec(p["bc1"]), vec(p["bc2"]),
            vec(p["bsca"]), vec(p["bc3"]) * betap, vec(p["g2"]), vec(p["b2n"]),
            vec(p["bc4"]), vec(p["bc5"]) * gammap]
    for j, v in enumerate(cols):
        pb = pb.at[:v.shape[0], j].set(v)

    # MXU weights as bf16 (f32 accumulation in-kernel); VPU-path weights as f32.
    w1 = p["w1"].astype(jnp.bfloat16)                        # (2C, C)  conv1 (a|b fused)
    w2 = p["w2"].astype(jnp.float32)                         # (2C, 9)  dw 3x3 taps
    wsca = p["wsca"].astype(jnp.float32)                     # (C, C)   SCA (VPU chain)
    w3 = (p["w3"] * betap[:, None]).astype(jnp.bfloat16)     # conv3, beta folded
    w4 = p["w4"].astype(jnp.bfloat16)                        # (2C, C)  conv4 (a|b fused)
    w5 = (p["w5"] * gammap[:, None]).astype(jnp.bfloat16)    # conv5, gamma folded

    consts = [gm, pb, w1, w2, wsca, w3, w4, w5]
    const_specs = [pl.BlockSpec(q.shape, lambda b: (0, 0)) for q in consts]

    # VMEM budget: 2x double-buffered IO blocks + ~14 live (C, L) f32
    # intermediates + small constants, capped below the physical VMEM of the
    # current generation (v7x has only 64 MiB -> cap at 5/8 of capacity).
    est = 4 * C * L * 18 + (2 << 20)
    try:
        cap = int(pltpu.get_tpu_info().vmem_capacity_bytes)
        if cap <= 0:
            cap = 128 << 20
    except Exception:
        cap = 128 << 20
    vmem_limit = int(min(max(est, 16 << 20), min(48 << 20, (cap * 5) // 8)))

    kernel = functools.partial(drm_kernel, H=H, W=W, eps=1e-6,
                               fuse_halves=(C % 8 == 0))
    out = pl.pallas_call(
        kernel,
        out_shape=jax.ShapeDtypeStruct((B, C, L), jnp.float32),
        grid_spec=pltpu.PrefetchScalarGridSpec(
            num_scalar_prefetch=0,
            grid=(B,),
            in_specs=[pl.BlockSpec((1, C, L), lambda b: (b, 0, 0))] + const_specs,
            out_specs=pl.BlockSpec((1, C, L), lambda b: (b, 0, 0)),
        ),
        compiler_params=pltpu.CompilerParams(
            dimension_semantics=("parallel",),      # B>=2 feeds both v7x TensorCores
            vmem_limit_bytes=vmem_limit,
        ),
    )(xf, *consts)

    # strip the trailing lane pad, the guard row and the guard column
    out = out[:, :, :HWp].reshape(B, C, Hp, Wp)[:, :, 1:, :W]
    return out


def drm_reference(inp, p):
    """Pure-JAX NCHW reference mirroring the PyTorch forward."""
    B, C, H, W = inp.shape
    eps = 1e-6
    n = C * H * W

    def ln(x, g, b):
        mean = jnp.mean(x, axis=(1, 2, 3), keepdims=True)
        var = jnp.sum((x - mean) ** 2, axis=(1, 2, 3), keepdims=True) / (n - 1)
        std = jnp.sqrt(var)
        return g.reshape(1, C, 1, 1) * ((x - mean) / (std + eps)) + b.reshape(1, C, 1, 1)

    def conv1x1(x, w, b):  # w: (Cout, Cin)
        return jnp.einsum("nihw,oi->nohw", x, w) + b.reshape(1, -1, 1, 1)

    def dwconv3(x, w, b):  # w: (C2, 9), zero pad 1
        xp = jnp.pad(x, ((0, 0), (0, 0), (1, 1), (1, 1)))
        out = jnp.zeros_like(x)
        k = 0
        for dh in (-1, 0, 1):
            for dw in (-1, 0, 1):
                out = out + xp[:, :, 1 + dh:1 + dh + H, 1 + dw:1 + dw + W] * w[:, k].reshape(1, -1, 1, 1)
                k += 1
        return out + b.reshape(1, -1, 1, 1)

    x = ln(inp, p["g1"], p["b1n"])
    x = conv1x1(x, p["w1"], p["bc1"])
    x = dwconv3(x, p["w2"], p["bc2"])
    x = x[:, :C] * x[:, C:]
    pooled = jnp.mean(x, axis=(2, 3), keepdims=True)
    sca = conv1x1(pooled, p["wsca"], p["bsca"])
    x = x * sca
    x = conv1x1(x, p["w3"], p["bc3"])
    y = inp + x * p["betap"].reshape(1, C, 1, 1)
    t = ln(y, p["g2"], p["b2n"])
    t = conv1x1(t, p["w4"], p["bc4"])
    t = t[:, :C] * t[:, C:]
    t = conv1x1(t, p["w5"], p["bc5"])
    return y + t * p["gammap"].reshape(1, C, 1, 1)


def init_params(key, c):
    c2 = 2 * c
    ks = jax.random.split(key, 14)
    rn = lambda k, shape, s=0.1: (s * jax.random.normal(k, shape)).astype(jnp.float32)
    return {
        # LayerNorm2d params (torch inits ones/zeros; kept here)
        "g1": jnp.ones((c,), jnp.float32), "b1n": jnp.zeros((c,), jnp.float32),
        "g2": jnp.ones((c,), jnp.float32), "b2n": jnp.zeros((c,), jnp.float32),
        # conv weights stored torch-style as (Cout, Cin); dw conv as (C2, 9)
        "w1": rn(ks[0], (c2, c)), "bc1": rn(ks[1], (c2,)),
        "w2": rn(ks[2], (c2, 9)), "bc2": rn(ks[3], (c2,)),
        "wsca": rn(ks[4], (c, c)), "bsca": rn(ks[5], (c,)),
        "w3": rn(ks[6], (c, c)), "bc3": rn(ks[7], (c,)),
        "w4": rn(ks[8], (c2, c)), "bc4": rn(ks[9], (c2,)),
        "w5": rn(ks[10], (c, c)), "bc5": rn(ks[11], (c,)),
        # residual scales (torch inits to zero -> forward would be identity;
        # use small random values so the full path is exercised)
        "betap": rn(ks[12], (c,)), "gammap": rn(ks[13], (c,)),
    }


if __name__ == "__main__":
    # C = 8 keeps the shapes small while exercising the production code path
    # (fused a/b half matmuls + bf16 MXU dots need C % 8 == 0).
    B, C, H, W = 2, 8, 16, 16
    key = jax.random.PRNGKey(0)
    k_inp, k_par = jax.random.split(key)
    inp = jax.random.normal(k_inp, (B, C, H, W), dtype=jnp.float32)
    params = init_params(k_par, C)

    out = jax.block_until_ready(jax.jit(drm_forward)(inp, params))

    ref = drm_reference(inp, params)
    # bf16 MXU operands (with f32 accumulation) trade ~1e-3-level absolute
    # error for 3-6x MXU throughput; verify against the f32 reference at 5e-3.
    if not bool(jnp.allclose(out, ref, rtol=5e-3, atol=5e-3)):
        err = float(jnp.max(jnp.abs(out - ref)))
        raise AssertionError(
            f"Pallas DRM kernel mismatch vs. JAX reference (max abs err {err})")

    print("KERNEL_OK")
</pallas_src>

<mosaic_0001>
module attributes {stable_mosaic.version = 11 : i64} {
  func.func @drm_kernel(%arg0: i32, %arg1: memref<1x8x384xf32, #tpu.memory_space<vmem>>, %arg2: memref<1x384xf32, #tpu.memory_space<vmem>>, %arg3: memref<16x10xf32, #tpu.memory_space<vmem>>, %arg4: memref<16x8xbf16, #tpu.memory_space<vmem>>, %arg5: memref<16x9xf32, #tpu.memory_space<vmem>>, %arg6: memref<8x8xf32, #tpu.memory_space<vmem>>, %arg7: memref<8x8xbf16, #tpu.memory_space<vmem>>, %arg8: memref<16x8xbf16, #tpu.memory_space<vmem>>, %arg9: memref<8x8xbf16, #tpu.memory_space<vmem>>, %arg10: memref<1x8x384xf32, #tpu.memory_space<vmem>>) attributes {dimension_semantics = [#tpu.dimension_semantics<parallel>], iteration_bounds = array<i64: 2>, scalar_prefetch = 0 : i64, scratch_operands = 0 : i64, tpu.core_type = #tpu.core_type<tc>, window_params = [{transform_indices = @transform_0, window_bounds = array<i64: 1, 8, 384>}, {pipeline_mode = #tpu.pipeline_mode<synchronous>, transform_indices = @transform_1, window_bounds = array<i64: 1, 384>}, {pipeline_mode = #tpu.pipeline_mode<synchronous>, transform_indices = @transform_2, window_bounds = array<i64: 16, 10>}, {pipeline_mode = #tpu.pipeline_mode<synchronous>, transform_indices = @transform_3, window_bounds = array<i64: 16, 8>}, {pipeline_mode = #tpu.pipeline_mode<synchronous>, transform_indices = @transform_4, window_bounds = array<i64: 16, 9>}, {pipeline_mode = #tpu.pipeline_mode<synchronous>, transform_indices = @transform_5, window_bounds = array<i64: 8, 8>}, {pipeline_mode = #tpu.pipeline_mode<synchronous>, transform_indices = @transform_6, window_bounds = array<i64: 8, 8>}, {pipeline_mode = #tpu.pipeline_mode<synchronous>, transform_indices = @transform_7, window_bounds = array<i64: 16, 8>}, {pipeline_mode = #tpu.pipeline_mode<synchronous>, transform_indices = @transform_8, window_bounds = array<i64: 8, 8>}, {transform_indices = @transform_9, window_bounds = array<i64: 1, 8, 384>}]} {
    %c0 = arith.constant 0 : index
    %c0_0 = arith.constant 0 : index
    %c0_1 = arith.constant 0 : index
    %0 = vector.load %arg1[%c0, %c0_0, %c0_1] : memref<1x8x384xf32, #tpu.memory_space<vmem>>, vector<1x8x384xf32>
    %1 = vector.shape_cast %0 : vector<1x8x384xf32> to vector<8x384xf32>
    %c0_2 = arith.constant 0 : index
    %c0_3 = arith.constant 0 : index
    %2 = vector.load %arg2[%c0_2, %c0_3] : memref<1x384xf32, #tpu.memory_space<vmem>>, vector<1x384xf32>
    %3 = vector.shape_cast %2 : vector<1x384xf32> to vector<1x384xf32>
    %4 = vector.broadcast %3 : vector<1x384xf32> to vector<8x384xf32>
    %c0_4 = arith.constant 0 : index
    %c0_5 = arith.constant 0 : index
    %5 = vector.load %arg3[%c0_4, %c0_5] : memref<16x10xf32, #tpu.memory_space<vmem>>, vector<16x10xf32>
    %c0_6 = arith.constant 0 : index
    %c0_7 = arith.constant 0 : index
    %6 = vector.load %arg5[%c0_6, %c0_7] : memref<16x9xf32, #tpu.memory_space<vmem>>, vector<16x9xf32>
    %7 = vector.extract_strided_slice %5 {offsets = [0, 0], sizes = [8, 1], strides = [1, 1]} : vector<16x10xf32> to vector<8x1xf32>
    %8 = vector.extract_strided_slice %5 {offsets = [0, 1], sizes = [8, 1], strides = [1, 1]} : vector<16x10xf32> to vector<8x1xf32>
    %9 = vector.extract_strided_slice %5 {offsets = [0, 2], sizes = [16, 1], strides = [1, 1]} : vector<16x10xf32> to vector<16x1xf32>
    %10 = vector.extract_strided_slice %5 {offsets = [0, 3], sizes = [16, 1], strides = [1, 1]} : vector<16x10xf32> to vector<16x1xf32>
    %11 = vector.extract_strided_slice %5 {offsets = [0, 4], sizes = [8, 1], strides = [1, 1]} : vector<16x10xf32> to vector<8x1xf32>
    %12 = vector.extract_strided_slice %5 {offsets = [0, 5], sizes = [8, 1], strides = [1, 1]} : vector<16x10xf32> to vector<8x1xf32>
    %13 = vector.extract_strided_slice %5 {offsets = [0, 6], sizes = [8, 1], strides = [1, 1]} : vector<16x10xf32> to vector<8x1xf32>
    %14 = vector.extract_strided_slice %5 {offsets = [0, 7], sizes = [8, 1], strides = [1, 1]} : vector<16x10xf32> to vector<8x1xf32>
    %15 = vector.extract_strided_slice %5 {offsets = [0, 8], sizes = [16, 1], strides = [1, 1]} : vector<16x10xf32> to vector<16x1xf32>
    %16 = vector.extract_strided_slice %5 {offsets = [0, 9], sizes = [8, 1], strides = [1, 1]} : vector<16x10xf32> to vector<8x1xf32>
    %17 = vector.shape_cast %1 : vector<8x384xf32> to vector<1x8x384xf32>
    %cst = arith.constant dense<0.000000e+00> : vector<1xf32>
    %18 = vector.multi_reduction <add>, %17, %cst [1, 2] : vector<1x8x384xf32> to vector<1xf32>
    %19 = vector.shape_cast %18 : vector<1xf32> to vector<1x1x1xf32>
    %20 = vector.extract %19[0, 0, 0] : f32 from vector<1x1x1xf32>
    %21 = vector.broadcast %20 : f32 to vector<1x1xf32>
    %cst_8 = arith.constant 4.8828125E-4 : f32
    %22 = vector.broadcast %cst_8 : f32 to vector<1x1xf32>
    %23 = arith.mulf %21, %22 : vector<1x1xf32>
    %24 = vector.broadcast %23 : vector<1x1xf32> to vector<8x384xf32>
    %25 = arith.subf %1, %24 : vector<8x384xf32>
    %26 = arith.mulf %25, %4 : vector<8x384xf32>
    %27 = arith.mulf %26, %26 : vector<8x384xf32>
    %28 = vector.shape_cast %27 : vector<8x384xf32> to vector<1x8x384xf32>
    %cst_9 = arith.constant dense<0.000000e+00> : vector<1xf32>
    %29 = vector.multi_reduction <add>, %28, %cst_9 [1, 2] : vector<1x8x384xf32> to vector<1xf32>
    %30 = vector.shape_cast %29 : vector<1xf32> to vector<1x1x1xf32>
    %31 = vector.extract %30[0, 0, 0] : f32 from vector<1x1x1xf32>
    %32 = vector.broadcast %31 : f32 to vector<1x1xf32>
    %cst_10 = arith.constant 4.88519785E-4 : f32
    %33 = vector.broadcast %cst_10 : f32 to vector<1x1xf32>
    %34 = arith.mulf %32, %33 : vector<1x1xf32>
    %35 = math.sqrt %34 : vector<1x1xf32>
    %cst_11 = arith.constant 9.99999997E-7 : f32
    %36 = vector.broadcast %cst_11 : f32 to vector<1x1xf32>
    %37 = arith.addf %35, %36 : vector<1x1xf32>
    %cst_12 = arith.constant 1.000000e+00 : f32
    %38 = vector.broadcast %cst_12 : f32 to vector<1x1xf32>
    %39 = arith.divf %38, %37 : vector<1x1xf32>
    %40 = vector.broadcast %39 : vector<1x1xf32> to vector<8x1xf32>
    %41 = arith.mulf %7, %40 : vector<8x1xf32>
    %42 = vector.broadcast %41 : vector<8x1xf32> to vector<8x384xf32>
    %43 = arith.mulf %26, %42 : vector<8x384xf32>
    %44 = vector.broadcast %8 : vector<8x1xf32> to vector<8x384xf32>
    %45 = arith.addf %43, %44 : vector<8x384xf32>
    %46 = arith.truncf %45 : vector<8x384xf32> to vector<8x384xbf16>
    %c0_13 = arith.constant 0 : index
    %c0_14 = arith.constant 0 : index
    %47 = vector.load %arg4[%c0_13, %c0_14] : memref<16x8xbf16, #tpu.memory_space<vmem>>, vector<16x8xbf16>
    %cst_15 = arith.constant dense<0.000000e+00> : vector<16x384xf32>
    %48 = tpu.matmul %47, %46, %cst_15 {dimension_numbers = #tpu.dot_dimension_numbers<[1], [0], [0], [1], [0, 0, 1, 1], [], []>} : vector<16x8xbf16>, vector<8x384xbf16>, vector<16x384xf32> -> vector<16x384xf32>
    %49 = vector.broadcast %9 : vector<16x1xf32> to vector<16x384xf32>
    %50 = arith.addf %48, %49 : vector<16x384xf32>
    %51 = vector.extract_strided_slice %50 {offsets = [0, 0], sizes = [8, 384], strides = [1, 1]} : vector<16x384xf32> to vector<8x384xf32>
    %52 = arith.mulf %51, %4 : vector<8x384xf32>
    %53 = vector.extract_strided_slice %50 {offsets = [8, 0], sizes = [8, 384], strides = [1, 1]} : vector<16x384xf32> to vector<8x384xf32>
    %54 = arith.mulf %53, %4 : vector<8x384xf32>
    %55 = vector.extract_strided_slice %6 {offsets = [0, 0], sizes = [8, 9], strides = [1, 1]} : vector<16x9xf32> to vector<8x9xf32>
    %56 = vector.extract_strided_slice %10 {offsets = [0, 0], sizes = [8, 1], strides = [1, 1]} : vector<16x1xf32> to vector<8x1xf32>
    %57 = vector.extract_strided_slice %55 {offsets = [0, 4], sizes = [8, 1], strides = [1, 1]} : vector<8x9xf32> to vector<8x1xf32>
    %58 = vector.broadcast %57 : vector<8x1xf32> to vector<8x384xf32>
    %59 = arith.mulf %52, %58 : vector<8x384xf32>
    %60 = vector.broadcast %56 : vector<8x1xf32> to vector<8x384xf32>
    %61 = arith.addf %59, %60 : vector<8x384xf32>
    %c18_i32 = arith.constant 18 : i32
    %62 = tpu.dynamic_rotate %52 by %c18_i32 dim 1 : vector<8x384xf32>, i32 -> vector<8x384xf32>
    %63 = vector.extract_strided_slice %55 {offsets = [0, 0], sizes = [8, 1], strides = [1, 1]} : vector<8x9xf32> to vector<8x1xf32>
    %64 = vector.broadcast %63 : vector<8x1xf32> to vector<8x384xf32>
    %65 = arith.mulf %62, %64 : vector<8x384xf32>
    %66 = arith.addf %61, %65 : vector<8x384xf32>
    %c17_i32 = arith.constant 17 : i32
    %67 = tpu.dynamic_rotate %52 by %c17_i32 dim 1 : vector<8x384xf32>, i32 -> vector<8x384xf32>
    %68 = vector.extract_strided_slice %55 {offsets = [0, 1], sizes = [8, 1], strides = [1, 1]} : vector<8x9xf32> to vector<8x1xf32>
    %69 = vector.broadcast %68 : vector<8x1xf32> to vector<8x384xf32>
    %70 = arith.mulf %67, %69 : vector<8x384xf32>
    %71 = arith.addf %66, %70 : vector<8x384xf32>
    %c16_i32 = arith.constant 16 : i32
    %72 = tpu.dynamic_rotate %52 by %c16_i32 dim 1 : vector<8x384xf32>, i32 -> vector<8x384xf32>
    %73 = vector.extract_strided_slice %55 {offsets = [0, 2], sizes = [8, 1], strides = [1, 1]} : vector<8x9xf32> to vector<8x1xf32>
    %74 = vector.broadcast %73 : vector<8x1xf32> to vector<8x384xf32>
    %75 = arith.mulf %72, %74 : vector<8x384xf32>
    %76 = arith.addf %71, %75 : vector<8x384xf32>
    %c1_i32 = arith.constant 1 : i32
    %77 = tpu.dynamic_rotate %52 by %c1_i32 dim 1 : vector<8x384xf32>, i32 -> vector<8x384xf32>
    %78 = vector.extract_strided_slice %55 {offsets = [0, 3], sizes = [8, 1], strides = [1, 1]} : vector<8x9xf32> to vector<8x1xf32>
    %79 = vector.broadcast %78 : vector<8x1xf32> to vector<8x384xf32>
    %80 = arith.mulf %77, %79 : vector<8x384xf32>
    %81 = arith.addf %76, %80 : vector<8x384xf32>
    %c383_i32 = arith.constant 383 : i32
    %82 = tpu.dynamic_rotate %52 by %c383_i32 dim 1 : vector<8x384xf32>, i32 -> vector<8x384xf32>
    %83 = vector.extract_strided_slice %55 {offsets = [0, 5], sizes = [8, 1], strides = [1, 1]} : vector<8x9xf32> to vector<8x1xf32>
    %84 = vector.broadcast %83 : vector<8x1xf32> to vector<8x384xf32>
    %85 = arith.mulf %82, %84 : vector<8x384xf32>
    %86 = arith.addf %81, %85 : vector<8x384xf32>
    %c368_i32 = arith.constant 368 : i32
    %87 = tpu.dynamic_rotate %52 by %c368_i32 dim 1 : vector<8x384xf32>, i32 -> vector<8x384xf32>
    %88 = vector.extract_strided_slice %55 {offsets = [0, 6], sizes = [8, 1], strides = [1, 1]} : vector<8x9xf32> to vector<8x1xf32>
    %89 = vector.broadcast %88 : vector<8x1xf32> to vector<8x384xf32>
    %90 = arith.mulf %87, %89 : vector<8x384xf32>
    %91 = arith.addf %86, %90 : vector<8x384xf32>
    %c367_i32 = arith.constant 367 : i32
    %92 = tpu.dynamic_rotate %52 by %c367_i32 dim 1 : vector<8x384xf32>, i32 -> vector<8x384xf32>
    %93 = vector.extract_strided_slice %55 {offsets = [0, 7], sizes = [8, 1], strides = [1, 1]} : vector<8x9xf32> to vector<8x1xf32>
    %94 = vector.broadcast %93 : vector<8x1xf32> to vector<8x384xf32>
    %95 = arith.mulf %92, %94 : vector<8x384xf32>
    %96 = arith.addf %91, %95 : vector<8x384xf32>
    %c366_i32 = arith.constant 366 : i32
    %97 = tpu.dynamic_rotate %52 by %c366_i32 dim 1 : vector<8x384xf32>, i32 -> vector<8x384xf32>
    %98 = vector.extract_strided_slice %55 {offsets = [0, 8], sizes = [8, 1], strides = [1, 1]} : vector<8x9xf32> to vector<8x1xf32>
    %99 = vector.broadcast %98 : vector<8x1xf32> to vector<8x384xf32>
    %100 = arith.mulf %97, %99 : vector<8x384xf32>
    %101 = arith.addf %96, %100 : vector<8x384xf32>
    %102 = vector.extract_strided_slice %6 {offsets = [8, 0], sizes = [8, 9], strides = [1, 1]} : vector<16x9xf32> to vector<8x9xf32>
    %103 = vector.extract_strided_slice %10 {offsets = [8, 0], sizes = [8, 1], strides = [1, 1]} : vector<16x1xf32> to vector<8x1xf32>
    %104 = vector.extract_strided_slice %102 {offsets = [0, 4], sizes = [8, 1], strides = [1, 1]} : vector<8x9xf32> to vector<8x1xf32>
    %105 = vector.broadcast %104 : vector<8x1xf32> to vector<8x384xf32>
    %106 = arith.mulf %54, %105 : vector<8x384xf32>
    %107 = vector.broadcast %103 : vector<8x1xf32> to vector<8x384xf32>
    %108 = arith.addf %106, %107 : vector<8x384xf32>
    %c18_i32_16 = arith.constant 18 : i32
    %109 = tpu.dynamic_rotate %54 by %c18_i32_16 dim 1 : vector<8x384xf32>, i32 -> vector<8x384xf32>
    %110 = vector.extract_strided_slice %102 {offsets = [0, 0], sizes = [8, 1], strides = [1, 1]} : vector<8x9xf32> to vector<8x1xf32>
    %111 = vector.broadcast %110 : vector<8x1xf32> to vector<8x384xf32>
    %112 = arith.mulf %109, %111 : vector<8x384xf32>
    %113 = arith.addf %108, %112 : vector<8x384xf32>
    %c17_i32_17 = arith.constant 17 : i32
    %114 = tpu.dynamic_rotate %54 by %c17_i32_17 dim 1 : vector<8x384xf32>, i32 -> vector<8x384xf32>
    %115 = vector.extract_strided_slice %102 {offsets = [0, 1], sizes = [8, 1], strides = [1, 1]} : vector<8x9xf32> to vector<8x1xf32>
    %116 = vector.broadcast %115 : vector<8x1xf32> to vector<8x384xf32>
    %117 = arith.mulf %114, %116 : vector<8x384xf32>
    %118 = arith.addf %113, %117 : vector<8x384xf32>
    %c16_i32_18 = arith.constant 16 : i32
    %119 = tpu.dynamic_rotate %54 by %c16_i32_18 dim 1 : vector<8x384xf32>, i32 -> vector<8x384xf32>
    %120 = vector.extract_strided_slice %102 {offsets = [0, 2], sizes = [8, 1], strides = [1, 1]} : vector<8x9xf32> to vector<8x1xf32>
    %121 = vector.broadcast %120 : vector<8x1xf32> to vector<8x384xf32>
    %122 = arith.mulf %119, %121 : vector<8x384xf32>
    %123 = arith.addf %118, %122 : vector<8x384xf32>
    %c1_i32_19 = arith.constant 1 : i32
    %124 = tpu.dynamic_rotate %54 by %c1_i32_19 dim 1 : vector<8x384xf32>, i32 -> vector<8x384xf32>
    %125 = vector.extract_strided_slice %102 {offsets = [0, 3], sizes = [8, 1], strides = [1, 1]} : vector<8x9xf32> to vector<8x1xf32>
    %126 = vector.broadcast %125 : vector<8x1xf32> to vector<8x384xf32>
    %127 = arith.mulf %124, %126 : vector<8x384xf32>
    %128 = arith.addf %123, %127 : vector<8x384xf32>
    %c383_i32_20 = arith.constant 383 : i32
    %129 = tpu.dynamic_rotate %54 by %c383_i32_20 dim 1 : vector<8x384xf32>, i32 -> vector<8x384xf32>
    %130 = vector.extract_strided_slice %102 {offsets = [0, 5], sizes = [8, 1], strides = [1, 1]} : vector<8x9xf32> to vector<8x1xf32>
    %131 = vector.broadcast %130 : vector<8x1xf32> to vector<8x384xf32>
    %132 = arith.mulf %129, %131 : vector<8x384xf32>
    %133 = arith.addf %128, %132 : vector<8x384xf32>
    %c368_i32_21 = arith.constant 368 : i32
    %134 = tpu.dynamic_rotate %54 by %c368_i32_21 dim 1 : vector<8x384xf32>, i32 -> vector<8x384xf32>
    %135 = vector.extract_strided_slice %102 {offsets = [0, 6], sizes = [8, 1], strides = [1, 1]} : vector<8x9xf32> to vector<8x1xf32>
    %136 = vector.broadcast %135 : vector<8x1xf32> to vector<8x384xf32>
    %137 = arith.mulf %134, %136 : vector<8x384xf32>
    %138 = arith.addf %133, %137 : vector<8x384xf32>
    %c367_i32_22 = arith.constant 367 : i32
    %139 = tpu.dynamic_rotate %54 by %c367_i32_22 dim 1 : vector<8x384xf32>, i32 -> vector<8x384xf32>
    %140 = vector.extract_strided_slice %102 {offsets = [0, 7], sizes = [8, 1], strides = [1, 1]} : vector<8x9xf32> to vector<8x1xf32>
    %141 = vector.broadcast %140 : vector<8x1xf32> to vector<8x384xf32>
    %142 = arith.mulf %139, %141 : vector<8x384xf32>
    %143 = arith.addf %138, %142 : vector<8x384xf32>
    %c366_i32_23 = arith.constant 366 : i32
    %144 = tpu.dynamic_rotate %54 by %c366_i32_23 dim 1 : vector<8x384xf32>, i32 -> vector<8x384xf32>
    %145 = vector.extract_strided_slice %102 {offsets = [0, 8], sizes = [8, 1], strides = [1, 1]} : vector<8x9xf32> to vector<8x1xf32>
    %146 = vector.broadcast %145 : vector<8x1xf32> to vector<8x384xf32>
    %147 = arith.mulf %144, %146 : vector<8x384xf32>
    %148 = arith.addf %143, %147 : vector<8x384xf32>
    %149 = arith.mulf %101, %148 : vector<8x384xf32>
    %150 = arith.mulf %149, %4 : vector<8x384xf32>
    %cst_24 = arith.constant dense<0.000000e+00> : vector<8xf32>
    %151 = vector.multi_reduction <add>, %150, %cst_24 [1] : vector<8x384xf32> to vector<8xf32>
    %152 = vector.shape_cast %151 : vector<8xf32> to vector<8x1xf32>
    %cst_25 = arith.constant 3.906250e-03 : f32
    %153 = vector.broadcast %cst_25 : f32 to vector<8x1xf32>
    %154 = arith.mulf %152, %153 : vector<8x1xf32>
    %c0_26 = arith.constant 0 : index
    %c0_27 = arith.constant 0 : index
    %155 = vector.load %arg6[%c0_26, %c0_27] : memref<8x8xf32, #tpu.memory_space<vmem>>, vector<8x8xf32>
    %156 = vector.extract_strided_slice %155 {offsets = [0, 0], sizes = [8, 1], strides = [1, 1]} : vector<8x8xf32> to vector<8x1xf32>
    %157 = vector.extract_strided_slice %154 {offsets = [0, 0], sizes = [1, 1], strides = [1, 1]} : vector<8x1xf32> to vector<1x1xf32>
    %158 = vector.broadcast %157 : vector<1x1xf32> to vector<8x1xf32>
    %159 = arith.mulf %156, %158 : vector<8x1xf32>
    %160 = arith.addf %11, %159 : vector<8x1xf32>
    %161 = vector.extract_strided_slice %155 {offsets = [0, 1], sizes = [8, 1], strides = [1, 1]} : vector<8x8xf32> to vector<8x1xf32>
    %162 = vector.extract_strided_slice %154 {offsets = [1, 0], sizes = [1, 1], strides = [1, 1]} : vector<8x1xf32> to vector<1x1xf32>
    %163 = vector.broadcast %162 : vector<1x1xf32> to vector<8x1xf32>
    %164 = arith.mulf %161, %163 : vector<8x1xf32>
    %165 = arith.addf %160, %164 : vector<8x1xf32>
    %166 = vector.extract_strided_slice %155 {offsets = [0, 2], sizes = [8, 1], strides = [1, 1]} : vector<8x8xf32> to vector<8x1xf32>
    %167 = vector.extract_strided_slice %154 {offsets = [2, 0], sizes = [1, 1], strides = [1, 1]} : vector<8x1xf32> to vector<1x1xf32>
    %168 = vector.broadcast %167 : vector<1x1xf32> to vector<8x1xf32>
    %169 = arith.mulf %166, %168 : vector<8x1xf32>
    %170 = arith.addf %165, %169 : vector<8x1xf32>
    %171 = vector.extract_strided_slice %155 {offsets = [0, 3], sizes = [8, 1], strides = [1, 1]} : vector<8x8xf32> to vector<8x1xf32>
    %172 = vector.extract_strided_slice %154 {offsets = [3, 0], sizes = [1, 1], strides = [1, 1]} : vector<8x1xf32> to vector<1x1xf32>
    %173 = vector.broadcast %172 : vector<1x1xf32> to vector<8x1xf32>
    %174 = arith.mulf %171, %173 : vector<8x1xf32>
    %175 = arith.addf %170, %174 : vector<8x1xf32>
    %176 = vector.extract_strided_slice %155 {offsets = [0, 4], sizes = [8, 1], strides = [1, 1]} : vector<8x8xf32> to vector<8x1xf32>
    %177 = vector.extract_strided_slice %154 {offsets = [4, 0], sizes = [1, 1], strides = [1, 1]} : vector<8x1xf32> to vector<1x1xf32>
    %178 = vector.broadcast %177 : vector<1x1xf32> to vector<8x1xf32>
    %179 = arith.mulf %176, %178 : vector<8x1xf32>
    %180 = arith.addf %175, %179 : vector<8x1xf32>
    %181 = vector.extract_strided_slice %155 {offsets = [0, 5], sizes = [8, 1], strides = [1, 1]} : vector<8x8xf32> to vector<8x1xf32>
    %182 = vector.extract_strided_slice %154 {offsets = [5, 0], sizes = [1, 1], strides = [1, 1]} : vector<8x1xf32> to vector<1x1xf32>
    %183 = vector.broadcast %182 : vector<1x1xf32> to vector<8x1xf32>
    %184 = arith.mulf %181, %183 : vector<8x1xf32>
    %185 = arith.addf %180, %184 : vector<8x1xf32>
    %186 = vector.extract_strided_slice %155 {offsets = [0, 6], sizes = [8, 1], strides = [1, 1]} : vector<8x8xf32> to vector<8x1xf32>
    %187 = vector.extract_strided_slice %154 {offsets = [6, 0], sizes = [1, 1], strides = [1, 1]} : vector<8x1xf32> to vector<1x1xf32>
    %188 = vector.broadcast %187 : vector<1x1xf32> to vector<8x1xf32>
    %189 = arith.mulf %186, %188 : vector<8x1xf32>
    %190 = arith.addf %185, %189 : vector<8x1xf32>
    %191 = vector.extract_strided_slice %155 {offsets = [0, 7], sizes = [8, 1], strides = [1, 1]} : vector<8x8xf32> to vector<8x1xf32>
    %192 = vector.extract_strided_slice %154 {offsets = [7, 0], sizes = [1, 1], strides = [1, 1]} : vector<8x1xf32> to vector<1x1xf32>
    %193 = vector.broadcast %192 : vector<1x1xf32> to vector<8x1xf32>
    %194 = arith.mulf %191, %193 : vector<8x1xf32>
    %195 = arith.addf %190, %194 : vector<8x1xf32>
    %196 = vector.broadcast %195 : vector<8x1xf32> to vector<8x384xf32>
    %197 = arith.mulf %150, %196 : vector<8x384xf32>
    %c0_28 = arith.constant 0 : index
    %c0_29 = arith.constant 0 : index
    %198 = vector.load %arg7[%c0_28, %c0_29] : memref<8x8xbf16, #tpu.memory_space<vmem>>, vector<8x8xbf16>
    %199 = arith.truncf %197 : vector<8x384xf32> to vector<8x384xbf16>
    %cst_30 = arith.constant dense<0.000000e+00> : vector<8x384xf32>
    %200 = tpu.matmul %198, %199, %cst_30 {dimension_numbers = #tpu.dot_dimension_numbers<[1], [0], [0], [1], [0, 0, 1, 1], [], []>} : vector<8x8xbf16>, vector<8x384xbf16>, vector<8x384xf32> -> vector<8x384xf32>
    %201 = arith.addf %1, %200 : vector<8x384xf32>
    %202 = vector.broadcast %12 : vector<8x1xf32> to vector<8x384xf32>
    %203 = arith.addf %201, %202 : vector<8x384xf32>
    %204 = arith.mulf %203, %4 : vector<8x384xf32>
    %205 = vector.shape_cast %204 : vector<8x384xf32> to vector<1x8x384xf32>
    %cst_31 = arith.constant dense<0.000000e+00> : vector<1xf32>
    %206 = vector.multi_reduction <add>, %205, %cst_31 [1, 2] : vector<1x8x384xf32> to vector<1xf32>
    %207 = vector.shape_cast %206 : vector<1xf32> to vector<1x1x1xf32>
    %208 = vector.extract %207[0, 0, 0] : f32 from vector<1x1x1xf32>
    %209 = vector.broadcast %208 : f32 to vector<1x1xf32>
    %cst_32 = arith.constant 4.8828125E-4 : f32
    %210 = vector.broadcast %cst_32 : f32 to vector<1x1xf32>
    %211 = arith.mulf %209, %210 : vector<1x1xf32>
    %212 = vector.broadcast %211 : vector<1x1xf32> to vector<8x384xf32>
    %213 = arith.subf %204, %212 : vector<8x384xf32>
    %214 = arith.mulf %213, %4 : vector<8x384xf32>
    %215 = arith.mulf %214, %214 : vector<8x384xf32>
    %216 = vector.shape_cast %215 : vector<8x384xf32> to vector<1x8x384xf32>
    %cst_33 = arith.constant dense<0.000000e+00> : vector<1xf32>
    %217 = vector.multi_reduction <add>, %216, %cst_33 [1, 2] : vector<1x8x384xf32> to vector<1xf32>
    %218 = vector.shape_cast %217 : vector<1xf32> to vector<1x1x1xf32>
    %219 = vector.extract %218[0, 0, 0] : f32 from vector<1x1x1xf32>
    %220 = vector.broadcast %219 : f32 to vector<1x1xf32>
    %cst_34 = arith.constant 4.88519785E-4 : f32
    %221 = vector.broadcast %cst_34 : f32 to vector<1x1xf32>
    %222 = arith.mulf %220, %221 : vector<1x1xf32>
    %223 = math.sqrt %222 : vector<1x1xf32>
    %cst_35 = arith.constant 9.99999997E-7 : f32
    %224 = vector.broadcast %cst_35 : f32 to vector<1x1xf32>
    %225 = arith.addf %223, %224 : vector<1x1xf32>
    %cst_36 = arith.constant 1.000000e+00 : f32
    %226 = vector.broadcast %cst_36 : f32 to vector<1x1xf32>
    %227 = arith.divf %226, %225 : vector<1x1xf32>
    %228 = vector.broadcast %227 : vector<1x1xf32> to vector<8x1xf32>
    %229 = arith.mulf %13, %228 : vector<8x1xf32>
    %230 = vector.broadcast %229 : vector<8x1xf32> to vector<8x384xf32>
    %231 = arith.mulf %214, %230 : vector<8x384xf32>
    %232 = vector.broadcast %14 : vector<8x1xf32> to vector<8x384xf32>
    %233 = arith.addf %231, %232 : vector<8x384xf32>
    %234 = arith.truncf %233 : vector<8x384xf32> to vector<8x384xbf16>
    %c0_37 = arith.constant 0 : index
    %c0_38 = arith.constant 0 : index
    %235 = vector.load %arg8[%c0_37, %c0_38] : memref<16x8xbf16, #tpu.memory_space<vmem>>, vector<16x8xbf16>
    %cst_39 = arith.constant dense<0.000000e+00> : vector<16x384xf32>
    %236 = tpu.matmul %235, %234, %cst_39 {dimension_numbers = #tpu.dot_dimension_numbers<[1], [0], [0], [1], [0, 0, 1, 1], [], []>} : vector<16x8xbf16>, vector<8x384xbf16>, vector<16x384xf32> -> vector<16x384xf32>
    %237 = vector.broadcast %15 : vector<16x1xf32> to vector<16x384xf32>
    %238 = arith.addf %236, %237 : vector<16x384xf32>
    %239 = vector.extract_strided_slice %238 {offsets = [0, 0], sizes = [8, 384], strides = [1, 1]} : vector<16x384xf32> to vector<8x384xf32>
    %240 = vector.extract_strided_slice %238 {offsets = [8, 0], sizes = [8, 384], strides = [1, 1]} : vector<16x384xf32> to vector<8x384xf32>
    %241 = arith.mulf %239, %240 : vector<8x384xf32>
    %c0_40 = arith.constant 0 : index
    %c0_41 = arith.constant 0 : index
    %242 = vector.load %arg9[%c0_40, %c0_41] : memref<8x8xbf16, #tpu.memory_space<vmem>>, vector<8x8xbf16>
    %243 = arith.truncf %241 : vector<8x384xf32> to vector<8x384xbf16>
    %cst_42 = arith.constant dense<0.000000e+00> : vector<8x384xf32>
    %244 = tpu.matmul %242, %243, %cst_42 {dimension_numbers = #tpu.dot_dimension_numbers<[1], [0], [0], [1], [0, 0, 1, 1], [], []>} : vector<8x8xbf16>, vector<8x384xbf16>, vector<8x384xf32> -> vector<8x384xf32>
    %245 = arith.addf %204, %244 : vector<8x384xf32>
    %246 = vector.broadcast %16 : vector<8x1xf32> to vector<8x384xf32>
    %247 = arith.addf %245, %246 : vector<8x384xf32>
    %c0_43 = arith.constant 0 : index
    %c0_44 = arith.constant 0 : index
    %c0_45 = arith.constant 0 : index
    %248 = vector.load %arg10[%c0_43, %c0_44, %c0_45] : memref<1x8x384xf32, #tpu.memory_space<vmem>>, vector<1x8x384xf32>
    %249 = vector.shape_cast %248 : vector<1x8x384xf32> to vector<8x384xf32>
    %250 = vector.shape_cast %247 : vector<8x384xf32> to vector<1x8x384xf32>
    tpu.vector_store %arg10[%c0_43, %c0_44, %c0_45], %250 {strides = array<i32>} : memref<1x8x384xf32, #tpu.memory_space<vmem>>, vector<1x8x384xf32>,
    return
  }
  func.func @transform_0(%arg0: i32) -> (i32, i32, i32) {
    %c0_i32 = arith.constant 0 : i32
    %c0_i32_0 = arith.constant 0 : i32
    %c0_i32_1 = arith.constant 0 : i32
    return %arg0, %c0_i32, %c0_i32_0 : i32, i32, i32
  }
  func.func @transform_1(%arg0: i32) -> (i32, i32) {
    %c0_i32 = arith.constant 0 : i32
    %c0_i32_0 = arith.constant 0 : i32
    %c0_i32_1 = arith.constant 0 : i32
    return %c0_i32, %c0_i32_0 : i32, i32
  }
  func.func @transform_2(%arg0: i32) -> (i32, i32) {
    %c0_i32 = arith.constant 0 : i32
    %c0_i32_0 = arith.constant 0 : i32
    %c0_i32_1 = arith.constant 0 : i32
    return %c0_i32, %c0_i32_0 : i32, i32
  }
  func.func @transform_3(%arg0: i32) -> (i32, i32) {
    %c0_i32 = arith.constant 0 : i32
    %c0_i32_0 = arith.constant 0 : i32
    %c0_i32_1 = arith.constant 0 : i32
    return %c0_i32, %c0_i32_0 : i32, i32
  }
  func.func @transform_4(%arg0: i32) -> (i32, i32) {
    %c0_i32 = arith.constant 0 : i32
    %c0_i32_0 = arith.constant 0 : i32
    %c0_i32_1 = arith.constant 0 : i32
    return %c0_i32, %c0_i32_0 : i32, i32
  }
  func.func @transform_5(%arg0: i32) -> (i32, i32) {
    %c0_i32 = arith.constant 0 : i32
    %c0_i32_0 = arith.constant 0 : i32
    %c0_i32_1 = arith.constant 0 : i32
    return %c0_i32, %c0_i32_0 : i32, i32
  }
  func.func @transform_6(%arg0: i32) -> (i32, i32) {
    %c0_i32 = arith.constant 0 : i32
    %c0_i32_0 = arith.constant 0 : i32
    %c0_i32_1 = arith.constant 0 : i32
    return %c0_i32, %c0_i32_0 : i32, i32
  }
  func.func @transform_7(%arg0: i32) -> (i32, i32) {
    %c0_i32 = arith.constant 0 : i32
    %c0_i32_0 = arith.constant 0 : i32
    %c0_i32_1 = arith.constant 0 : i32
    return %c0_i32, %c0_i32_0 : i32, i32
  }
  func.func @transform_8(%arg0: i32) -> (i32, i32) {
    %c0_i32 = arith.constant 0 : i32
    %c0_i32_0 = arith.constant 0 : i32
    %c0_i32_1 = arith.constant 0 : i32
    return %c0_i32, %c0_i32_0 : i32, i32
  }
  func.func @transform_9(%arg0: i32) -> (i32, i32, i32) {
    %c0_i32 = arith.constant 0 : i32
    %c0_i32_0 = arith.constant 0 : i32
    %c0_i32_1 = arith.constant 0 : i32
    return %arg0, %c0_i32, %c0_i32_0 : i32, i32, i32
  }
}

</mosaic_0001>

<llo_original>
// kernel: drm_forward.1
$region0: #{drm_forward.1}
  #allocation0 [shape = 'u32[]', space=smem, size = 0x4, offset = 0x4, fixed_abs, tag = 'smem constant byte address 0x4 - core index']
  #allocation1 [shape = 'u32[144,128]{1,0:T(1,128)}', space=vmem, size = 0x12000, scoped, tag = 'internal scratch']
  %s0 = inlined_call_operand.vmem [shape: f32[2,8,384], index: 0, kind: input, shape index: {}]
  %s1 = inlined_call_operand.vmem [shape: f32[1,384], index: 1, kind: input, shape index: {}]
  %s2 = inlined_call_operand.vmem [shape: f32[16,10], index: 2, kind: input, shape index: {}]
  %s3 = inlined_call_operand.vmem [shape: bf16[16,8], index: 3, kind: input, shape index: {}]
  %s4 = inlined_call_operand.vmem [shape: f32[16,9], index: 4, kind: input, shape index: {}]
  %s5 = inlined_call_operand.vmem [shape: f32[8,8], index: 5, kind: input, shape index: {}]
  %s6 = inlined_call_operand.vmem [shape: bf16[8,8], index: 6, kind: input, shape index: {}]
  %s7 = inlined_call_operand.vmem [shape: bf16[16,8], index: 7, kind: input, shape index: {}]
  %s8 = inlined_call_operand.vmem [shape: bf16[8,8], index: 8, kind: input, shape index: {}]
  %s9 = inlined_call_operand.vmem [shape: f32[2,8,384], index: 9, kind: output, shape index: {}]
  %s10 = sld [smem:[#allocation0]]
  $region69: #{drm_forward.1} parent=0
    _
  %s12 = ssub.s32 1, %s10
  %s13 = scalar_select 0, %s12, %s10
  loop: start=0, step=1, limit=4
  $region2: #{drm_forward.1} parent=0 // loop_pre_header
    _
  $region3: #{drm_forward.1} parent=0 // loop_header
    %s15 = sphi 0, %s19
    %p16 = scmp.ge.s32.totalorder %s15, 4
    %s25 = sphi 0, %s27
    %s28 = sphi 0, %s25
    %s29 = sphi 0, %s28
    %s45 = sphi 0, %s29
    %s49 = sphi 0, %s49
    %s51 = sphi 0, %s49
    %s52 = sphi 0, %s51
    %s66 = sphi 0, %s52
    %s70 = sphi 0, %s70
    %s72 = sphi 0, %s70
    %s73 = sphi 0, %s72
    %s87 = sphi 0, %s73
    %s91 = sphi 0, %s91
    %s93 = sphi 0, %s91
    %s94 = sphi 0, %s93
    %s108 = sphi 0, %s94
    %s112 = sphi 0, %s112
    %s114 = sphi 0, %s112
    %s115 = sphi 0, %s114
    %s129 = sphi 0, %s115
    %s133 = sphi 0, %s133
    %s135 = sphi 0, %s133
    %s136 = sphi 0, %s135
    %s150 = sphi 0, %s136
    %s154 = sphi 0, %s154
    %s156 = sphi 0, %s154
    %s157 = sphi 0, %s156
    %s171 = sphi 0, %s157
    %s175 = sphi 0, %s175
    %s177 = sphi 0, %s175
    %s178 = sphi 0, %s177
    %s192 = sphi 0, %s178
    %s196 = sphi 0, %s196
    %s198 = sphi 0, %s196
    %s199 = sphi 0, %s198
    %s213 = sphi 0, %s199
    %s219 = sphi 0, %s221
    %s222 = sphi 0, %s219
    %s223 = sphi 0, %s222
    %s239 = sphi 0, %s223
  $region4: #{drm_forward.1} parent=0 // loop_header_branch
    %18 = sbr.rel (%p16) target = $region8
  $region5: #{drm_forward.1} parent=0 // loop_body
    %s20 = ssub.s32 %s15, 1
    %s21 = ssub.s32 %s15, 2
    %s22 = sadd.s32 %s15, 1
    %s23 = ssub.s32 %s15, %s22
    %p24 = scmp.eq.s32.totalorder %s23, 0
    %s26 = sadd.s32 %s25, 1
    %s27 = scalar_select %p24, %s25, %s26
    %p30 = pneg %p24
    %p31 = scmp.eq.s32.totalorder %s15, 1
    %p32 = por %p30, %p31
    %p33 = scmp.ne.s32.totalorder %s25, %s28
    %p34 = scmp.eq.s32.totalorder %s15, 0
    %p35 = por %p33, %p34
    %p36 = scmp.ne.s32.totalorder %s25, %s28
    %p37 = scmp.eq.s32.totalorder %s20, 1
    %p38 = por %p36, %p37
    %p39 = scmp.ne.s32.totalorder %s28, %s29
    %p40 = scmp.eq.s32.totalorder %s20, 0
    %p41 = por %p39, %p40
    %p42 = scmp.ne.s32.totalorder %s28, %s29
    %p43 = scmp.eq.s32.totalorder %s21, 1
    %p44 = por %p42, %p43
    %p46 = scmp.ne.s32.totalorder %s29, %s45
    %p47 = scmp.eq.s32.totalorder %s21, 0
    %p48 = por %p46, %p47
    %s50 = sadd.s32 %s49, 1
    %p53 = scmp.eq.s32.totalorder %s15, 1
    %p54 = scmp.ne.s32.totalorder %s49, %s51
    %p55 = scmp.eq.s32.totalorder %s15, 0
    %p56 = por %p54, %p55
    %p57 = scmp.ne.s32.totalorder %s49, %s51
    %p58 = scmp.eq.s32.totalorder %s20, 1
    %p59 = por %p57, %p58
    %p60 = scmp.ne.s32.totalorder %s51, %s52
    %p61 = scmp.eq.s32.totalorder %s20, 0
    %p62 = por %p60, %p61
    %p63 = scmp.ne.s32.totalorder %s51, %s52
    %p64 = scmp.eq.s32.totalorder %s21, 1
    %p65 = por %p63, %p64
    %p67 = scmp.ne.s32.totalorder %s52, %s66
    %p68 = scmp.eq.s32.totalorder %s21, 0
    %p69 = por %p67, %p68
    %s71 = sadd.s32 %s70, 1
    %p74 = scmp.eq.s32.totalorder %s15, 1
    %p75 = scmp.ne.s32.totalorder %s70, %s72
    %p76 = scmp.eq.s32.totalorder %s15, 0
    %p77 = por %p75, %p76
    %p78 = scmp.ne.s32.totalorder %s70, %s72
    %p79 = scmp.eq.s32.totalorder %s20, 1
    %p80 = por %p78, %p79
    %p81 = scmp.ne.s32.totalorder %s72, %s73
    %p82 = scmp.eq.s32.totalorder %s20, 0
    %p83 = por %p81, %p82
    %p84 = scmp.ne.s32.totalorder %s72, %s73
    %p85 = scmp.eq.s32.totalorder %s21, 1
    %p86 = por %p84, %p85
    %p88 = scmp.ne.s32.totalorder %s73, %s87
    %p89 = scmp.eq.s32.totalorder %s21, 0
    %p90 = por %p88, %p89
    %s92 = sadd.s32 %s91, 1
    %p95 = scmp.eq.s32.totalorder %s15, 1
    %p96 = scmp.ne.s32.totalorder %s91, %s93
    %p97 = scmp.eq.s32.totalorder %s15, 0
    %p98 = por %p96, %p97
    %p99 = scmp.ne.s32.totalorder %s91, %s93
    %p100 = scmp.eq.s32.totalorder %s20, 1
    %p101 = por %p99, %p100
    %p102 = scmp.ne.s32.totalorder %s93, %s94
    %p103 = scmp.eq.s32.totalorder %s20, 0
    %p104 = por %p102, %p103
    %p105 = scmp.ne.s32.totalorder %s93, %s94
    %p106 = scmp.eq.s32.totalorder %s21, 1
    %p107 = por %p105, %p106
    %p109 = scmp.ne.s32.totalorder %s94, %s108
    %p110 = scmp.eq.s32.totalorder %s21, 0
    %p111 = por %p109, %p110
    %s113 = sadd.s32 %s112, 1
    %p116 = scmp.eq.s32.totalorder %s15, 1
    %p117 = scmp.ne.s32.totalorder %s112, %s114
    %p118 = scmp.eq.s32.totalorder %s15, 0
    %p119 = por %p117, %p118
    %p120 = scmp.ne.s32.totalorder %s112, %s114
    %p121 = scmp.eq.s32.totalorder %s20, 1
    %p122 = por %p120, %p121
    %p123 = scmp.ne.s32.totalorder %s114, %s115
    %p124 = scmp.eq.s32.totalorder %s20, 0
    %p125 = por %p123, %p124
    %p126 = scmp.ne.s32.totalorder %s114, %s115
    %p127 = scmp.eq.s32.totalorder %s21, 1
    %p128 = por %p126, %p127
    %p130 = scmp.ne.s32.totalorder %s115, %s129
    %p131 = scmp.eq.s32.totalorder %s21, 0
    %p132 = por %p130, %p131
    %s134 = sadd.s32 %s133, 1
    %p137 = scmp.eq.s32.totalorder %s15, 1
    %p138 = scmp.ne.s32.totalorder %s133, %s135
    %p139 = scmp.eq.s32.totalorder %s15, 0
    %p140 = por %p138, %p139
    %p141 = scmp.ne.s32.totalorder %s133, %s135
    %p142 = scmp.eq.s32.totalorder %s20, 1
    %p143 = por %p141, %p142
    %p144 = scmp.ne.s32.totalorder %s135, %s136
    %p145 = scmp.eq.s32.totalorder %s20, 0
    %p146 = por %p144, %p145
    %p147 = scmp.ne.s32.totalorder %s135, %s136
    %p148 = scmp.eq.s32.totalorder %s21, 1
    %p149 = por %p147, %p148
    %p151 = scmp.ne.s32.totalorder %s136, %s150
    %p152 = scmp.eq.s32.totalorder %s21, 0
    %p153 = por %p151, %p152
    %s155 = sadd.s32 %s154, 1
    %p158 = scmp.eq.s32.totalorder %s15, 1
    %p159 = scmp.ne.s32.totalorder %s154, %s156
    %p160 = scmp.eq.s32.totalorder %s15, 0
    %p161 = por %p159, %p160
    %p162 = scmp.ne.s32.totalorder %s154, %s156
    %p163 = scmp.eq.s32.totalorder %s20, 1
    %p164 = por %p162, %p163
    %p165 = scmp.ne.s32.totalorder %s156, %s157
    %p166 = scmp.eq.s32.totalorder %s20, 0
    %p167 = por %p165, %p166
    %p168 = scmp.ne.s32.totalorder %s156, %s157
    %p169 = scmp.eq.s32.totalorder %s21, 1
    %p170 = por %p168, %p169
    %p172 = scmp.ne.s32.totalorder %s157, %s171
    %p173 = scmp.eq.s32.totalorder %s21, 0
    %p174 = por %p172, %p173
    %s176 = sadd.s32 %s175, 1
    %p179 = scmp.eq.s32.totalorder %s15, 1
    %p180 = scmp.ne.s32.totalorder %s175, %s177
    %p181 = scmp.eq.s32.totalorder %s15, 0
    %p182 = por %p180, %p181
    %p183 = scmp.ne.s32.totalorder %s175, %s177
    %p184 = scmp.eq.s32.totalorder %s20, 1
    %p185 = por %p183, %p184
    %p186 = scmp.ne.s32.totalorder %s177, %s178
    %p187 = scmp.eq.s32.totalorder %s20, 0
    %p188 = por %p186, %p187
    %p189 = scmp.ne.s32.totalorder %s177, %s178
    %p190 = scmp.eq.s32.totalorder %s21, 1
    %p191 = por %p189, %p190
    %p193 = scmp.ne.s32.totalorder %s178, %s192
    %p194 = scmp.eq.s32.totalorder %s21, 0
    %p195 = por %p193, %p194
    %s197 = sadd.s32 %s196, 1
    %p200 = scmp.eq.s32.totalorder %s15, 1
    %p201 = scmp.ne.s32.totalorder %s196, %s198
    %p202 = scmp.eq.s32.totalorder %s15, 0
    %p203 = por %p201, %p202
    %p204 = scmp.ne.s32.totalorder %s196, %s198
    %p205 = scmp.eq.s32.totalorder %s20, 1
    %p206 = por %p204, %p205
    %p207 = scmp.ne.s32.totalorder %s198, %s199
    %p208 = scmp.eq.s32.totalorder %s20, 0
    %p209 = por %p207, %p208
    %p210 = scmp.ne.s32.totalorder %s198, %s199
    %p211 = scmp.eq.s32.totalorder %s21, 1
    %p212 = por %p210, %p211
    %p214 = scmp.ne.s32.totalorder %s199, %s213
    %p215 = scmp.eq.s32.totalorder %s21, 0
    %p216 = por %p214, %p215
    %s217 = ssub.s32 %s15, %s22
    %p218 = scmp.eq.s32.totalorder %s217, 0
    %s220 = sadd.s32 %s219, 1
    %s221 = scalar_select %p218, %s219, %s220
    %p224 = pneg %p218
    %p225 = scmp.eq.s32.totalorder %s15, 1
    %p226 = por %p224, %p225
    %p227 = scmp.ne.s32.totalorder %s219, %s222
    %p228 = scmp.eq.s32.totalorder %s15, 0
    %p229 = por %p227, %p228
    %p230 = scmp.ne.s32.totalorder %s219, %s222
    %p231 = scmp.eq.s32.totalorder %s20, 1
    %p232 = por %p230, %p231
    %p233 = scmp.ne.s32.totalorder %s222, %s223
    %p234 = scmp.eq.s32.totalorder %s20, 0
    %p235 = por %p233, %p234
    %p236 = scmp.ne.s32.totalorder %s222, %s223
    %p237 = scmp.eq.s32.totalorder %s21, 1
    %p238 = por %p236, %p237
    %p240 = scmp.ne.s32.totalorder %s223, %s239
    %p241 = scmp.eq.s32.totalorder %s21, 0
    %p242 = por %p240, %p241
    %p243 = scmp.le.s32.totalorder 1, %s15
    %p244 = scmp.lt.s32.totalorder %s15, 3
    %p245 = pnand %p243, %p244
    %p246 = pneg %p245
    // Predicated region
    $region9: #{drm_forward.1} parent=5 // pred_check
      _
    $region10: #{drm_forward.1} parent=5 // pred_check_branch
      %248 = sbr.rel (%p245) target = $region12
    $region11: #{drm_forward.1} parent=5 // pred_region
      %s249 = ssub.s32 %s15, 1
      // Predicated region
      $region13: #{drm_forward.1} parent=11 // pred_check
        %p250 = pneg %p62
      $region14: #{drm_forward.1} parent=11 // pred_check_branch
        %252 = sbr.rel (%p250) target = $region16
      $region15: #{drm_forward.1} parent=11 // pred_region
        _
      $region16: #{drm_forward.1} parent=11 // pred_fallthru
        _
      // Predicated region
      $region17: #{drm_forward.1} parent=11 // pred_check
        %p253 = pneg %p83
      $region18: #{drm_forward.1} parent=11 // pred_check_branch
        %255 = sbr.rel (%p253) target = $region20
      $region19: #{drm_forward.1} parent=11 // pred_region
        _
      $region20: #{drm_forward.1} parent=11 // pred_fallthru
        _
      // Predicated region
      $region21: #{drm_forward.1} parent=11 // pred_check
        %p256 = pneg %p104
      $region22: #{drm_forward.1} parent=11 // pred_check_branch
        %258 = sbr.rel (%p256) target = $region24
      $region23: #{drm_forward.1} parent=11 // pred_region
        _
      $region24: #{drm_forward.1} parent=11 // pred_fallthru
        _
      // Predicated region
      $region25: #{drm_forward.1} parent=11 // pred_check
        %p259 = pneg %p125
      $region26: #{drm_forward.1} parent=11 // pred_check_branch
        %261 = sbr.rel (%p259) target = $region28
      $region27: #{drm_forward.1} parent=11 // pred_region
        _
      $region28: #{drm_forward.1} parent=11 // pred_fallthru
        _
      // Predicated region
      $region29: #{drm_forward.1} parent=11 // pred_check
        %p262 = pneg %p146
      $region30: #{drm_forward.1} parent=11 // pred_check_branch
        %264 = sbr.rel (%p262) target = $region32
      $region31: #{drm_forward.1} parent=11 // pred_region
        _
      $region32: #{drm_forward.1} parent=11 // pred_fallthru
        _
      // Predicated region
      $region33: #{drm_forward.1} parent=11 // pred_check
        %p265 = pneg %p167
      $region34: #{drm_forward.1} parent=11 // pred_check_branch
        %267 = sbr.rel (%p265) target = $region36
      $region35: #{drm_forward.1} parent=11 // pred_region
        _
      $region36: #{drm_forward.1} parent=11 // pred_fallthru
        _
      // Predicated region
      $region37: #{drm_forward.1} parent=11 // pred_check
        %p268 = pneg %p188
      $region38: #{drm_forward.1} parent=11 // pred_check_branch
        %270 = sbr.rel (%p268) target = $region40
      $region39: #{drm_forward.1} parent=11 // pred_region
        _
      $region40: #{drm_forward.1} parent=11 // pred_fallthru
        _
      // Predicated region
      $region41: #{drm_forward.1} parent=11 // pred_check
        %p271 = pneg %p209
      $region42: #{drm_forward.1} parent=11 // pred_check_branch
        %273 = sbr.rel (%p271) target = $region44
      $region43: #{drm_forward.1} parent=11 // pred_region
        _
      $region44: #{drm_forward.1} parent=11 // pred_fallthru
        _
    $region12: #{drm_forward.1} parent=5 // pred_fallthru
      _
    %p274 = scmp.lt.s32.totalorder %s15, 2
    // Predicated region
    $region45: #{drm_forward.1} parent=5 // pred_check
      %p275 = pneg %p274
    $region46: #{drm_forward.1} parent=5 // pred_check_branch
      %277 = sbr.rel (%p275) target = $region48
    $region47: #{drm_forward.1} parent=5 // pred_region
      // Predicated region
      $region49: #{drm_forward.1} parent=47 // pred_check
        %p278 = pneg %p35
      $region50: #{drm_forward.1} parent=47 // pred_check_branch
        %280 = sbr.rel (%p278) target = $region52
      $region51: #{drm_forward.1} parent=47 // pred_region
        %p281 = scmp.lt.s32.totalorder %s15, 1
        %s282 = scalar_select %p281, %s15, 1
        %s283 = smul.addr %s282, 3
        %s284 = smul.addr %s283, 8
        %s285 = scalar_lea.vmem %s0, %s284
      $region52: #{drm_forward.1} parent=47 // pred_fallthru
        _
    $region48: #{drm_forward.1} parent=5 // pred_fallthru
      _
    %p286 = scmp.le.s32.totalorder 1, %s15
    %p287 = scmp.lt.s32.totalorder %s15, 3
    %p288 = pnand %p286, %p287
    %p289 = pneg %p288
    // Predicated region
    $region53: #{drm_forward.1} parent=5 // pred_check
      _
    $region54: #{drm_forward.1} parent=5 // pred_check_branch
      %291 = sbr.rel (%p288) target = $region56
    $region55: #{drm_forward.1} parent=5 // pred_region
      %s292 = ssub.s32 %s15, 1
      %p293 = scmp.lt.s32.totalorder %s20, 1
      %s294 = scalar_select %p293, %s20, 1
      %s295 = smul.addr %s294, 3
      %s296 = smul.addr %s295, 8
      %s297 = scalar_lea.vmem %s0, %s296
      %p298 = pneg %p41
      %p299 = pneg %p38
      %p300 = pneg %p62
      %p301 = pneg %p59
      %p302 = pneg %p83
      %p303 = pneg %p80
      %p304 = pneg %p104
      %p305 = pneg %p101
      %p306 = pneg %p125
      %p307 = pneg %p122
      %p308 = pneg %p146
      %p309 = pneg %p143
      %p310 = pneg %p167
      %p311 = pneg %p164
      %p312 = pneg %p188
      %p313 = pneg %p185
      %p314 = pneg %p209
      %p315 = pneg %p206
      %p316 = pneg %p235
      %p317 = pneg %p232
      %p318 = scmp.lt.s32.totalorder %s20, 1
      %s319 = scalar_select %p318, %s20, 1
      %s320 = smul.addr %s319, 3
      %s321 = smul.addr %s320, 8
      %s322 = scalar_lea.vmem %s9, %s321
      %p323 = scmp.lt.s32.totalorder %s20, 1
      %s324 = scalar_select %p323, %s20, 1
      %s325 = smul.addr %s324, 3
      %s326 = smul.addr %s325, 8
      %s327 = scalar_lea.vmem %s0, %s326
      %p328 = scmp.lt.s32.totalorder %s20, 1
      %s329 = scalar_select %p328, %s20, 1
      %s330 = smul.addr %s329, 3
      %s331 = smul.addr %s330, 8
      %s332 = scalar_lea.vmem %s9, %s331
      %v334 = vld [vmem:[%s327] sm:$0xff]
      %v335 = vld [vmem:[%s327 + $0x8] sm:$0xff]
      %v336 = vld [vmem:[%s327 + $0x10] sm:$0xff]
      %v337 = vld [vmem:[%s1] sm:$0x7]
      %v339 = vlaneseq
      %v340 = vshrl.u32 %v339, 7
      %v341 = vsub.s32 0, %v340
      %v342 = vrot.slane %v337, %v341
      %v343 = vlaneseq
      %v344 = vshrl.u32 %v343, 7
      %v345 = vsub.s32 1, %v344
      %v346 = vrot.slane %v337, %v345
      %v347 = vlaneseq
      %v348 = vshrl.u32 %v347, 7
      %v349 = vsub.s32 2, %v348
      %v350 = vrot.slane %v337, %v349
      %v354 = vld [vmem:[%s2] sm:$0xff]
      %v355 = vld [vmem:[%s2 + $0x8] sm:$0xff]
      %v356 = vld [vmem:[%s4] sm:$0xff]
      %v357 = vld [vmem:[%s4 + $0x8] sm:$0xff]
      %v358 = vadd.f32 %v334, %v335
      %v359 = vadd.f32 %v358, %v336
      %360 = vadd.xlane.f32.xlu0 %v359
      %v361 = vpop.xlane.xlu0 %360
      %v362 = vrot.slane %v361, 4
      %v363 = vadd.f32 %v361, %v362
      %v364 = vrot.slane %v363, 2
      %v365 = vadd.f32 %v363, %v364
      %v366 = vrot.slane %v365, 1
      %v367 = vadd.f32 %v365, %v366
      %s368 = vtos %v367
      %v369 = vstv %s368
      %v370 = vmul.f32 %v369, 0.00048828125
      %v371 = vsub.f32 %v334, %v370
      %v372 = vsub.f32 %v335, %v370
      %v373 = vsub.f32 %v336, %v370
      %v374 = vmul.f32 %v371, %v342
      %v375 = vmul.f32 %v372, %v346
      %v376 = vmul.f32 %v373, %v350
      %v377 = vmul.f32 %v374, %v374
      %v378 = vmul.f32 %v375, %v375
      %v379 = vmul.f32 %v376, %v376
      %v380 = vadd.f32 %v377, %v378
      %v381 = vadd.f32 %v380, %v379
      %382 = vadd.xlane.f32.xlu0 %v381
      %v383 = vpop.xlane.xlu0 %382
      %v384 = vrot.slane %v383, 4
      %v385 = vadd.f32 %v383, %v384
      %v386 = vrot.slane %v385, 2
      %v387 = vadd.f32 %v385, %v386
      %v388 = vrot.slane %v387, 1
      %v389 = vadd.f32 %v387, %v388
      %s390 = vtos %v389
      %v391 = vstv %s390
      %v392 = vmul.f32 %v391, 0.0004885198
      %v393 = vrsqrt.pop %v392
      %v394 = vmul.f32 %v392, %v393
      %vm395 = vcmp.eq.f32.partialorder %v392, inf
      %v396 = vsel %vm395, %v392, %v394
      %vm397 = vcmp.eq.f32.partialorder %v392, 0.0
      %v398 = vand.u32 %v392, 2147483648
      %v399 = vsel %vm397, %v398, %v396
      %v400 = vadd.f32 %v399, 1e-06
      %v401 = vrcp.pop %v400
      %v402 = vmul.f32 1.0, %v401
      %v403 = vmul.f32 %v354, %v402
      %405 = vset.pattern.permute.xlu0 0
      %406 = vperm.xlu0 %405, %v403
      %v407 = vpop.permute.xlu0 %406
      %v409 = vmul.f32 %v374, %v407
      %v410 = vmul.f32 %v375, %v407
      %v411 = vmul.f32 %v376, %v407
      %413 = vset.pattern.permute.xlu0 1
      %414 = vperm.xlu0 %413, %v354
      %v415 = vpop.permute.xlu0 %414
      %v417 = vadd.f32 %v409, %v415
      %v418 = vadd.f32 %v410, %v415
      %v419 = vadd.f32 %v411, %v415
      %v420 = vpack.c.bf16 %v417, %v417
      %v421 = vpack.c.bf16 %v418, %v418
      %v422 = vpack.c.bf16 %v419, %v419
      %v423 = vld [vmem:[%s3] sm:$0xf]
      %v424 = vld [vmem:[%s3 + $0x4] sm:$0xf]
      %425 = vset.pattern.permute.xlu0 2
      %426 = vperm.xlu0 %425, %v354
      %v427 = vpop.permute.xlu0 %426
      %430 = vset.pattern.permute.xlu0 2
      %431 = vperm.xlu0 %430, %v355
      %v432 = vpop.permute.xlu0 %431
      %v436 = vunpack.c.l.b16 %v423
      %v437 = vunpack.c.l.b16 %v424
      %v438 = vpack.c.b16 %v437, %v436
      %vm439 = vcmask 64512
      %v441 = vsel %vm439, %v438, 0
      %vm443 = vcmask 1043456
      %v445 = vsel %vm443, %v420, 0
      %v448 = vsel %vm443, %v421, 0
      %v451 = vsel %vm443, %v422, 0
      %453 = vmatprep.subr.bf16.mxu0 0
      %454 = vmatpush1.bf16.msra.mxu0 0
      %455 = vmatprep.subr.bf16.mxu0 0
      %456 = vmatpush1.bf16.msra.mxu0 0
      %457 = vmatprep.subr.bf16.mxu0 0
      %458 = vmatpush1.bf16.msra.mxu0 0
      %459 = vmatprep.subr.bf16.mxu0 0
      %460 = vmatpush1.bf16.msra.mxu0 0
      %461 = vmatprep.subr.bf16.mxu0 0
      %462 = vmatpush1.bf16.msra.mxu0 0
      %463 = vmatprep.subr.bf16.mxu0 0
      %464 = vmatpush1.bf16.msra.mxu0 0
      %465 = vmatprep.subr.bf16.mxu0 0
      %466 = vmatpush1.bf16.msra.mxu0 0
      %467 = vmatprep.subr.bf16.mxu0 %v448
      %468 = vmatpush1.bf16.msra.mxu0 %v445
      %469 = vmatprep.subr.bf16.mxu0 0
      %470 = vmatpush2.bf16.msra.mxu0 0
      %471 = vmatprep.subr.bf16.mxu0 0
      %472 = vmatpush2.bf16.msra.mxu0 0
      %473 = vmatprep.subr.bf16.mxu0 0
      %474 = vmatpush2.bf16.msra.mxu0 0
      %475 = vmatprep.subr.bf16.mxu0 0
      %476 = vmatpush2.bf16.msra.mxu0 0
      %477 = vmatprep.subr.bf16.mxu0 0
      %478 = vmatpush2.bf16.msra.mxu0 0
      %479 = vmatprep.subr.bf16.mxu0 0
      %480 = vmatpush2.bf16.msra.mxu0 0
      %481 = vmatprep.subr.bf16.mxu0 0
      %482 = vmatpush2.bf16.msra.mxu0 0
      %483 = vmatprep.subr.bf16.mxu0 0
      %484 = vmatpush2.bf16.msra.mxu0 0
      %485 = vmatprep.mubr.bf16.mxu0 0
      %486 = vmatmul.mubr.bf16.gmra.mxu0 %v441
      %v487 = vpop.f32.mrf.mxu0
      %v488 = vadd.f32 %v427, %v487
      %v489 = vpop.f32.mrf.mxu0
      %v490 = vadd.f32 %v427, %v489
      %v491 = vpop.f32.mrf.mxu0
      %v492 = vadd.f32 %v432, %v491
      %v493 = vpop.f32.mrf.mxu0
      %v494 = vadd.f32 %v432, %v493
      %495 = vdwg.mxu0
      %496 = vmatprep.subr.bf16.mxu0 0
      %497 = vmatpush1.bf16.msra.mxu0 0
      %498 = vmatprep.subr.bf16.mxu0 0
      %499 = vmatpush1.bf16.msra.mxu0 0
      %500 = vmatprep.subr.bf16.mxu0 0
      %501 = vmatpush1.bf16.msra.mxu0 0
      %502 = vmatprep.subr.bf16.mxu0 0
      %503 = vmatpush1.bf16.msra.mxu0 0
      %504 = vmatprep.subr.bf16.mxu0 0
      %505 = vmatpush1.bf16.msra.mxu0 0
      %506 = vmatprep.subr.bf16.mxu0 0
      %507 = vmatpush1.bf16.msra.mxu0 0
      %508 = vmatprep.subr.bf16.mxu0 0
      %509 = vmatpush1.bf16.msra.mxu0 0
      %510 = vmatprep.subr.bf16.mxu0 0
      %511 = vmatpush1.bf16.msra.mxu0 %v451
      %512 = vmatprep.subr.bf16.mxu0 0
      %513 = vmatpush2.bf16.msra.mxu0 0
      %514 = vmatprep.subr.bf16.mxu0 0
      %515 = vmatpush2.bf16.msra.mxu0 0
      %516 = vmatprep.subr.bf16.mxu0 0
      %517 = vmatpush2.bf16.msra.mxu0 0
      %518 = vmatprep.subr.bf16.mxu0 0
      %519 = vmatpush2.bf16.msra.mxu0 0
      %520 = vmatprep.subr.bf16.mxu0 0
      %521 = vmatpush2.bf16.msra.mxu0 0
      %522 = vmatprep.subr.bf16.mxu0 0
      %523 = vmatpush2.bf16.msra.mxu0 0
      %524 = vmatprep.subr.bf16.mxu0 0
      %525 = vmatpush2.bf16.msra.mxu0 0
      %526 = vmatprep.subr.bf16.mxu0 0
      %527 = vmatpush2.bf16.msra.mxu0 0
      %528 = vmatprep.mubr.bf16.mxu0 0
      %529 = vmatmul.mubr.bf16.gmra.mxu0 %v441
      %v530 = vpop.f32.mrf.mxu0
      %v531 = vadd.f32 %v427, %v530
      %v532 = vpop.f32.mrf.mxu0
      %v533 = vpop.f32.mrf.mxu0
      %v534 = vadd.f32 %v432, %v533
      %v535 = vpop.f32.mrf.mxu0
      %536 = vdwg.mxu0
      %v537 = vmul.f32 %v488, %v342
      %v538 = vmul.f32 %v490, %v346
      %v539 = vmul.f32 %v531, %v350
      %v540 = vmul.f32 %v492, %v342
      %v541 = vmul.f32 %v494, %v346
      %v542 = vmul.f32 %v534, %v350
      %544 = vset.pattern.permute.xlu0 4
      %545 = vperm.xlu0 %544, %v356
      %v546 = vpop.permute.xlu0 %545
      %v548 = vmul.f32 %v537, %v546
      %v549 = vmul.f32 %v538, %v546
      %v550 = vmul.f32 %v539, %v546
      %551 = vset.pattern.permute.xlu0 3
      %552 = vperm.xlu0 %551, %v354
      %v553 = vpop.permute.xlu0 %552
      %v555 = vadd.f32 %v548, %v553
      %v556 = vadd.f32 %v549, %v553
      %v557 = vadd.f32 %v550, %v553
      %558 = vrot.lane.b32.xlu0 %v537, 18
      %v559 = vpop.permute.xlu0 %558
      %560 = vrot.lane.b32.xlu0 %v538, 18
      %v561 = vpop.permute.xlu0 %560
      %562 = vrot.lane.b32.xlu0 %v539, 18
      %v563 = vpop.permute.xlu0 %562
      %v564 = vlaneseq
      %v565 = vand.u32 %v564, 127
      %vm566 = vcmp.lt.s32.totalorder %v565, 18
      %v567 = vsel %vm566, %v561, %v563
      %v568 = vsel %vm566, %v559, %v561
      %v569 = vsel %vm566, %v563, %v559
      %570 = vset.pattern.permute.xlu0 0
      %571 = vperm.xlu0 %570, %v356
      %v572 = vpop.permute.xlu0 %571
      %v574 = vmul.f32 %v569, %v572
      %v575 = vmul.f32 %v568, %v572
      %v576 = vmul.f32 %v567, %v572
      %v577 = vadd.f32 %v555, %v574
      %v578 = vadd.f32 %v556, %v575
      %v579 = vadd.f32 %v557, %v576
      %580 = vrot.lane.b32.xlu0 %v537, 17
      %v581 = vpop.permute.xlu0 %580
      %582 = vrot.lane.b32.xlu0 %v538, 17
      %v583 = vpop.permute.xlu0 %582
      %584 = vrot.lane.b32.xlu0 %v539, 17
      %v585 = vpop.permute.xlu0 %584
      %vm586 = vcmp.lt.s32.totalorder %v565, 17
      %v587 = vsel %vm586, %v583, %v585
      %v588 = vsel %vm586, %v581, %v583
      %v589 = vsel %vm586, %v585, %v581
      %590 = vset.pattern.permute.xlu0 1
      %591 = vperm.xlu0 %590, %v356
      %v592 = vpop.permute.xlu0 %591
      %v594 = vmul.f32 %v589, %v592
      %v595 = vmul.f32 %v588, %v592
      %v596 = vmul.f32 %v587, %v592
      %v597 = vadd.f32 %v577, %v594
      %v598 = vadd.f32 %v578, %v595
      %v599 = vadd.f32 %v579, %v596
      %600 = vrot.lane.b32.xlu0 %v537, 16
      %v601 = vpop.permute.xlu0 %600
      %602 = vrot.lane.b32.xlu0 %v538, 16
      %v603 = vpop.permute.xlu0 %602
      %604 = vrot.lane.b32.xlu0 %v539, 16
      %v605 = vpop.permute.xlu0 %604
      %vm606 = vcmp.lt.s32.totalorder %v565, 16
      %v607 = vsel %vm606, %v603, %v605
      %v608 = vsel %vm606, %v601, %v603
      %v609 = vsel %vm606, %v605, %v601
      %610 = vset.pattern.permute.xlu0 2
      %611 = vperm.xlu0 %610, %v356
      %v612 = vpop.permute.xlu0 %611
      %v614 = vmul.f32 %v609, %v612
      %v615 = vmul.f32 %v608, %v612
      %v616 = vmul.f32 %v607, %v612
      %v617 = vadd.f32 %v597, %v614
      %v618 = vadd.f32 %v598, %v615
      %v619 = vadd.f32 %v599, %v616
      %620 = vrot.lane.b32.xlu0 %v537, 1
      %v621 = vpop.permute.xlu0 %620
      %622 = vrot.lane.b32.xlu0 %v538, 1
      %v623 = vpop.permute.xlu0 %622
      %624 = vrot.lane.b32.xlu0 %v539, 1
      %v625 = vpop.permute.xlu0 %624
      %vm626 = vcmp.lt.s32.totalorder %v565, 1
      %v627 = vsel %vm626, %v623, %v625
      %v628 = vsel %vm626, %v621, %v623
      %v629 = vsel %vm626, %v625, %v621
      %630 = vset.pattern.permute.xlu0 3
      %631 = vperm.xlu0 %630, %v356
      %v632 = vpop.permute.xlu0 %631
      %v634 = vmul.f32 %v629, %v632
      %v635 = vmul.f32 %v628, %v632
      %v636 = vmul.f32 %v627, %v632
      %v637 = vadd.f32 %v617, %v634
      %v638 = vadd.f32 %v618, %v635
      %v639 = vadd.f32 %v619, %v636
      %640 = vrot.lane.b32.xlu0 %v537, 127
      %v641 = vpop.permute.xlu0 %640
      %642 = vrot.lane.b32.xlu0 %v538, 127
      %v643 = vpop.permute.xlu0 %642
      %644 = vrot.lane.b32.xlu0 %v539, 127
      %v645 = vpop.permute.xlu0 %644
      %vm646 = vcmp.lt.s32.totalorder %v565, 127
      %v647 = vsel %vm646, %v643, %v645
      %v648 = vsel %vm646, %v641, %v643
      %v649 = vsel %vm646, %v645, %v641
      %650 = vset.pattern.permute.xlu0 5
      %651 = vperm.xlu0 %650, %v356
      %v652 = vpop.permute.xlu0 %651
      %v654 = vmul.f32 %v648, %v652
      %v655 = vmul.f32 %v647, %v652
      %v656 = vmul.f32 %v649, %v652
      %v657 = vadd.f32 %v637, %v654
      %v658 = vadd.f32 %v638, %v655
      %v659 = vadd.f32 %v639, %v656
      %660 = vrot.lane.b32.xlu0 %v537, 112
      %v661 = vpop.permute.xlu0 %660
      %662 = vrot.lane.b32.xlu0 %v538, 112
      %v663 = vpop.permute.xlu0 %662
      %664 = vrot.lane.b32.xlu0 %v539, 112
      %v665 = vpop.permute.xlu0 %664
      %vm666 = vcmp.lt.s32.totalorder %v565, 112
      %v667 = vsel %vm666, %v663, %v665
      %v668 = vsel %vm666, %v661, %v663
      %v669 = vsel %vm666, %v665, %v661
      %670 = vset.pattern.permute.xlu0 6
      %671 = vperm.xlu0 %670, %v356
      %v672 = vpop.permute.xlu0 %671
      %v674 = vmul.f32 %v668, %v672
      %v675 = vmul.f32 %v667, %v672
      %v676 = vmul.f32 %v669, %v672
      %v677 = vadd.f32 %v657, %v674
      %v678 = vadd.f32 %v658, %v675
      %v679 = vadd.f32 %v659, %v676
      %680 = vrot.lane.b32.xlu0 %v537, 111
      %v681 = vpop.permute.xlu0 %680
      %682 = vrot.lane.b32.xlu0 %v538, 111
      %v683 = vpop.permute.xlu0 %682
      %684 = vrot.lane.b32.xlu0 %v539, 111
      %v685 = vpop.permute.xlu0 %684
      %vm686 = vcmp.lt.s32.totalorder %v565, 111
      %v687 = vsel %vm686, %v683, %v685
      %v688 = vsel %vm686, %v681, %v683
      %v689 = vsel %vm686, %v685, %v681
      %690 = vset.pattern.permute.xlu0 7
      %691 = vperm.xlu0 %690, %v356
      %v692 = vpop.permute.xlu0 %691
      %v694 = vmul.f32 %v688, %v692
      %v695 = vmul.f32 %v687, %v692
      %v696 = vmul.f32 %v689, %v692
      %v697 = vadd.f32 %v677, %v694
      %v698 = vadd.f32 %v678, %v695
      %v699 = vadd.f32 %v679, %v696
      %700 = vrot.lane.b32.xlu0 %v537, 110
      %v701 = vpop.permute.xlu0 %700
      %702 = vrot.lane.b32.xlu0 %v538, 110
      %v703 = vpop.permute.xlu0 %702
      %704 = vrot.lane.b32.xlu0 %v539, 110
      %v705 = vpop.permute.xlu0 %704
      %vm706 = vcmp.lt.s32.totalorder %v565, 110
      %v707 = vsel %vm706, %v703, %v705
      %v708 = vsel %vm706, %v701, %v703
      %v709 = vsel %vm706, %v705, %v701
      %710 = vset.pattern.permute.xlu0 8
      %711 = vperm.xlu0 %710, %v356
      %v712 = vpop.permute.xlu0 %711
      %v714 = vmul.f32 %v708, %v712
      %v715 = vmul.f32 %v707, %v712
      %v716 = vmul.f32 %v709, %v712
      %v717 = vadd.f32 %v697, %v714
      %v718 = vadd.f32 %v698, %v715
      %v719 = vadd.f32 %v699, %v716
      %721 = vset.pattern.permute.xlu0 4
      %722 = vperm.xlu0 %721, %v357
      %v723 = vpop.permute.xlu0 %722
      %v725 = vmul.f32 %v540, %v723
      %v726 = vmul.f32 %v541, %v723
      %v727 = vmul.f32 %v542, %v723
      %728 = vset.pattern.permute.xlu0 3
      %729 = vperm.xlu0 %728, %v355
      %v730 = vpop.permute.xlu0 %729
      %v732 = vadd.f32 %v725, %v730
      %v733 = vadd.f32 %v726, %v730
      %v734 = vadd.f32 %v727, %v730
      %735 = vrot.lane.b32.xlu0 %v540, 18
      %v736 = vpop.permute.xlu0 %735
      %737 = vrot.lane.b32.xlu0 %v541, 18
      %v738 = vpop.permute.xlu0 %737
      %739 = vrot.lane.b32.xlu0 %v542, 18
      %v740 = vpop.permute.xlu0 %739
      %v741 = vsel %vm566, %v738, %v740
      %v742 = vsel %vm566, %v736, %v738
      %v743 = vsel %vm566, %v740, %v736
      %744 = vset.pattern.permute.xlu0 0
      %745 = vperm.xlu0 %744, %v357
      %v746 = vpop.permute.xlu0 %745
      %v748 = vmul.f32 %v743, %v746
      %v749 = vmul.f32 %v742, %v746
      %v750 = vmul.f32 %v741, %v746
      %v751 = vadd.f32 %v732, %v748
      %v752 = vadd.f32 %v733, %v749
      %v753 = vadd.f32 %v734, %v750
      %754 = vrot.lane.b32.xlu0 %v540, 17
      %v755 = vpop.permute.xlu0 %754
      %756 = vrot.lane.b32.xlu0 %v541, 17
      %v757 = vpop.permute.xlu0 %756
      %758 = vrot.lane.b32.xlu0 %v542, 17
      %v759 = vpop.permute.xlu0 %758
      %v760 = vsel %vm586, %v757, %v759
      %v761 = vsel %vm586, %v755, %v757
      %v762 = vsel %vm586, %v759, %v755
      %763 = vset.pattern.permute.xlu0 1
      %764 = vperm.xlu0 %763, %v357
      %v765 = vpop.permute.xlu0 %764
      %v767 = vmul.f32 %v762, %v765
      %v768 = vmul.f32 %v761, %v765
      %v769 = vmul.f32 %v760, %v765
      %v770 = vadd.f32 %v751, %v767
      %v771 = vadd.f32 %v752, %v768
      %v772 = vadd.f32 %v753, %v769
      %773 = vrot.lane.b32.xlu0 %v540, 16
      %v774 = vpop.permute.xlu0 %773
      %775 = vrot.lane.b32.xlu0 %v541, 16
      %v776 = vpop.permute.xlu0 %775
      %777 = vrot.lane.b32.xlu0 %v542, 16
      %v778 = vpop.permute.xlu0 %777
      %v779 = vsel %vm606, %v776, %v778
      %v780 = vsel %vm606, %v774, %v776
      %v781 = vsel %vm606, %v778, %v774
      %782 = vset.pattern.permute.xlu0 2
      %783 = vperm.xlu0 %782, %v357
      %v784 = vpop.permute.xlu0 %783
      %v786 = vmul.f32 %v781, %v784
      %v787 = vmul.f32 %v780, %v784
      %v788 = vmul.f32 %v779, %v784
      %v789 = vadd.f32 %v770, %v786
      %v790 = vadd.f32 %v771, %v787
      %v791 = vadd.f32 %v772, %v788
      %792 = vrot.lane.b32.xlu0 %v540, 1
      %v793 = vpop.permute.xlu0 %792
      %794 = vrot.lane.b32.xlu0 %v541, 1
      %v795 = vpop.permute.xlu0 %794
      %796 = vrot.lane.b32.xlu0 %v542, 1
      %v797 = vpop.permute.xlu0 %796
      %v798 = vsel %vm626, %v795, %v797
      %v799 = vsel %vm626, %v793, %v795
      %v800 = vsel %vm626, %v797, %v793
      %801 = vset.pattern.permute.xlu0 3
      %802 = vperm.xlu0 %801, %v357
      %v803 = vpop.permute.xlu0 %802
      %v805 = vmul.f32 %v800, %v803
      %v806 = vmul.f32 %v799, %v803
      %v807 = vmul.f32 %v798, %v803
      %v808 = vadd.f32 %v789, %v805
      %v809 = vadd.f32 %v790, %v806
      %v810 = vadd.f32 %v791, %v807
      %811 = vrot.lane.b32.xlu0 %v540, 127
      %v812 = vpop.permute.xlu0 %811
      %813 = vrot.lane.b32.xlu0 %v541, 127
      %v814 = vpop.permute.xlu0 %813
      %815 = vrot.lane.b32.xlu0 %v542, 127
      %v816 = vpop.permute.xlu0 %815
      %v817 = vsel %vm646, %v814, %v816
      %v818 = vsel %vm646, %v812, %v814
      %v819 = vsel %vm646, %v816, %v812
      %820 = vset.pattern.permute.xlu0 5
      %821 = vperm.xlu0 %820, %v357
      %v822 = vpop.permute.xlu0 %821
      %v824 = vmul.f32 %v818, %v822
      %v825 = vmul.f32 %v817, %v822
      %v826 = vmul.f32 %v819, %v822
      %v827 = vadd.f32 %v808, %v824
      %v828 = vadd.f32 %v809, %v825
      %v829 = vadd.f32 %v810, %v826
      %830 = vrot.lane.b32.xlu0 %v540, 112
      %v831 = vpop.permute.xlu0 %830
      %832 = vrot.lane.b32.xlu0 %v541, 112
      %v833 = vpop.permute.xlu0 %832
      %834 = vrot.lane.b32.xlu0 %v542, 112
      %v835 = vpop.permute.xlu0 %834
      %v836 = vsel %vm666, %v833, %v835
      %v837 = vsel %vm666, %v831, %v833
      %v838 = vsel %vm666, %v835, %v831
      %839 = vset.pattern.permute.xlu0 6
      %840 = vperm.xlu0 %839, %v357
      %v841 = vpop.permute.xlu0 %840
      %v843 = vmul.f32 %v837, %v841
      %v844 = vmul.f32 %v836, %v841
      %v845 = vmul.f32 %v838, %v841
      %v846 = vadd.f32 %v827, %v843
      %v847 = vadd.f32 %v828, %v844
      %v848 = vadd.f32 %v829, %v845
      %849 = vrot.lane.b32.xlu0 %v540, 111
      %v850 = vpop.permute.xlu0 %849
      %851 = vrot.lane.b32.xlu0 %v541, 111
      %v852 = vpop.permute.xlu0 %851
      %853 = vrot.lane.b32.xlu0 %v542, 111
      %v854 = vpop.permute.xlu0 %853
      %v855 = vsel %vm686, %v852, %v854
      %v856 = vsel %vm686, %v850, %v852
      %v857 = vsel %vm686, %v854, %v850
      %858 = vset.pattern.permute.xlu0 7
      %859 = vperm.xlu0 %858, %v357
      %v860 = vpop.permute.xlu0 %859
      %v862 = vmul.f32 %v856, %v860
      %v863 = vmul.f32 %v855, %v860
      %v864 = vmul.f32 %v857, %v860
      %v865 = vadd.f32 %v846, %v862
      %v866 = vadd.f32 %v847, %v863
      %v867 = vadd.f32 %v848, %v864
      %868 = vrot.lane.b32.xlu0 %v540, 110
      %v869 = vpop.permute.xlu0 %868
      %870 = vrot.lane.b32.xlu0 %v541, 110
      %v871 = vpop.permute.xlu0 %870
      %872 = vrot.lane.b32.xlu0 %v542, 110
      %v873 = vpop.permute.xlu0 %872
      %v874 = vsel %vm706, %v871, %v873
      %v875 = vsel %vm706, %v869, %v871
      %v876 = vsel %vm706, %v873, %v869
      %877 = vset.pattern.permute.xlu0 8
      %878 = vperm.xlu0 %877, %v357
      %v879 = vpop.permute.xlu0 %878
      %v881 = vmul.f32 %v875, %v879
      %v882 = vmul.f32 %v874, %v879
      %v883 = vmul.f32 %v876, %v879
      %v884 = vadd.f32 %v865, %v881
      %v885 = vadd.f32 %v866, %v882
      %v886 = vadd.f32 %v867, %v883
      %v887 = vmul.f32 %v717, %v884
      %v888 = vmul.f32 %v718, %v885
      %v889 = vmul.f32 %v719, %v886
      %v890 = vmul.f32 %v887, %v342
      %v891 = vmul.f32 %v888, %v346
      %v892 = vmul.f32 %v889, %v350
      %v893 = vadd.f32 %v890, %v891
      %v894 = vadd.f32 %v893, %v892
      %895 = vadd.xlane.f32.xlu0 %v894
      %v896 = vpop.xlane.xlu0 %895
      %v897 = vmul.f32 %v896, 0.00390625
      %v898 = vld [vmem:[%s5] sm:$0xff]
      %v899 = vlaneseq
      %v900 = vshrl.u32 %v899, 7
      %v901 = vsub.s32 0, %v900
      %v902 = vrot.slane %v897, %v901
      %v903 = vmul.f32 %v898, %v902
      %905 = vrot.lane.b32.xlu0 %v903, 4
      %v906 = vpop.permute.xlu0 %905
      %v908 = vadd.f32 %v354, %v906
      %v909 = vlaneseq
      %v910 = vshrl.u32 %v909, 7
      %v911 = vsub.s32 1, %v910
      %v912 = vrot.slane %v897, %v911
      %v913 = vmul.f32 %v898, %v912
      %915 = vrot.lane.b32.xlu0 %v913, 3
      %v916 = vpop.permute.xlu0 %915
      %v918 = vadd.f32 %v908, %v916
      %v919 = vlaneseq
      %v920 = vshrl.u32 %v919, 7
      %v921 = vsub.s32 2, %v920
      %v922 = vrot.slane %v897, %v921
      %v923 = vmul.f32 %v898, %v922
      %925 = vrot.lane.b32.xlu0 %v923, 2
      %v926 = vpop.permute.xlu0 %925
      %v928 = vadd.f32 %v918, %v926
      %v929 = vlaneseq
      %v930 = vshrl.u32 %v929, 7
      %v931 = vsub.s32 3, %v930
      %v932 = vrot.slane %v897, %v931
      %v933 = vmul.f32 %v898, %v932
      %935 = vrot.lane.b32.xlu0 %v933, 1
      %v936 = vpop.permute.xlu0 %935
      %v938 = vadd.f32 %v928, %v936
      %v939 = vlaneseq
      %v940 = vshrl.u32 %v939, 7
      %v941 = vsub.s32 4, %v940
      %v942 = vrot.slane %v897, %v941
      %v943 = vmul.f32 %v898, %v942
      %v944 = vadd.f32 %v938, %v943
      %v945 = vlaneseq
      %v946 = vshrl.u32 %v945, 7
      %v947 = vsub.s32 5, %v946
      %v948 = vrot.slane %v897, %v947
      %v949 = vmul.f32 %v898, %v948
      %951 = vrot.lane.b32.xlu0 %v949, 127
      %v952 = vpop.permute.xlu0 %951
      %v954 = vadd.f32 %v944, %v952
      %v955 = vlaneseq
      %v956 = vshrl.u32 %v955, 7
      %v957 = vsub.s32 6, %v956
      %v958 = vrot.slane %v897, %v957
      %v959 = vmul.f32 %v898, %v958
      %961 = vrot.lane.b32.xlu0 %v959, 126
      %v962 = vpop.permute.xlu0 %961
      %v964 = vadd.f32 %v954, %v962
      %v965 = vlaneseq
      %v966 = vshrl.u32 %v965, 7
      %v967 = vsub.s32 7, %v966
      %v968 = vrot.slane %v897, %v967
      %v969 = vmul.f32 %v898, %v968
      %971 = vrot.lane.b32.xlu0 %v969, 125
      %v972 = vpop.permute.xlu0 %971
      %v974 = vadd.f32 %v964, %v972
      %976 = vset.pattern.permute.xlu0 4
      %977 = vperm.xlu0 %976, %v974
      %v978 = vpop.permute.xlu0 %977
      %v980 = vmul.f32 %v890, %v978
      %v981 = vmul.f32 %v891, %v978
      %v982 = vmul.f32 %v892, %v978
      %v983 = vld [vmem:[%s6] sm:$0xf]
      %v984 = vpack.c.bf16 %v980, %v980
      %v985 = vpack.c.bf16 %v981, %v981
      %v986 = vpack.c.bf16 %v982, %v982
      %v988 = vsel %vm439, %v983, 0
      %v991 = vsel %vm443, %v984, 0
      %v994 = vsel %vm443, %v985, 0
      %v997 = vsel %vm443, %v986, 0
      %999 = vmatprep.subr.bf16.mxu0 0
      %1000 = vmatpush1.bf16.msra.mxu0 0
      %1001 = vmatprep.subr.bf16.mxu0 0
      %1002 = vmatpush1.bf16.msra.mxu0 0
      %1003 = vmatprep.subr.bf16.mxu0 0
      %1004 = vmatpush1.bf16.msra.mxu0 0
      %1005 = vmatprep.subr.bf16.mxu0 0
      %1006 = vmatpush1.bf16.msra.mxu0 0
      %1007 = vmatprep.subr.bf16.mxu0 0
      %1008 = vmatpush1.bf16.msra.mxu0 0
      %1009 = vmatprep.subr.bf16.mxu0 0
      %1010 = vmatpush1.bf16.msra.mxu0 0
      %1011 = vmatprep.subr.bf16.mxu0 0
      %1012 = vmatpush1.bf16.msra.mxu0 0
      %1013 = vmatprep.subr.bf16.mxu0 %v994
      %1014 = vmatpush1.bf16.msra.mxu0 %v991
      %1015 = vmatprep.subr.bf16.mxu0 0
      %1016 = vmatpush2.bf16.msra.mxu0 0
      %1017 = vmatprep.subr.bf16.mxu0 0
      %1018 = vmatpush2.bf16.msra.mxu0 0
      %1019 = vmatprep.subr.bf16.mxu0 0
      %1020 = vmatpush2.bf16.msra.mxu0 0
      %1021 = vmatprep.subr.bf16.mxu0 0
      %1022 = vmatpush2.bf16.msra.mxu0 0
      %1023 = vmatprep.subr.bf16.mxu0 0
      %1024 = vmatpush2.bf16.msra.mxu0 0
      %1025 = vmatprep.subr.bf16.mxu0 0
      %1026 = vmatpush2.bf16.msra.mxu0 0
      %1027 = vmatprep.subr.bf16.mxu0 0
      %1028 = vmatpush2.bf16.msra.mxu0 0
      %1029 = vmatprep.subr.bf16.mxu0 0
      %1030 = vmatpush2.bf16.msra.mxu0 0
      %1031 = vmatprep.mubr.bf16.mxu0 0
      %1032 = vmatmul.mubr.bf16.gmra.mxu0 %v988
      %v1033 = vpop.f32.mrf.mxu0
      %v1034 = vadd.f32 0.0, %v1033
      %v1035 = vpop.f32.mrf.mxu0
      %v1036 = vadd.f32 0.0, %v1035
      %v1037 = vpop.f32.mrf.mxu0
      %v1038 = vpop.f32.mrf.mxu0
      %1039 = vdwg.mxu0
      %1040 = vmatprep.subr.bf16.mxu0 0
      %1041 = vmatpush1.bf16.msra.mxu0 0
      %1042 = vmatprep.subr.bf16.mxu0 0
      %1043 = vmatpush1.bf16.msra.mxu0 0
      %1044 = vmatprep.subr.bf16.mxu0 0
      %1045 = vmatpush1.bf16.msra.mxu0 0
      %1046 = vmatprep.subr.bf16.mxu0 0
      %1047 = vmatpush1.bf16.msra.mxu0 0
      %1048 = vmatprep.subr.bf16.mxu0 0
      %1049 = vmatpush1.bf16.msra.mxu0 0
      %1050 = vmatprep.subr.bf16.mxu0 0
      %1051 = vmatpush1.bf16.msra.mxu0 0
      %1052 = vmatprep.subr.bf16.mxu0 0
      %1053 = vmatpush1.bf16.msra.mxu0 0
      %1054 = vmatprep.subr.bf16.mxu0 0
      %1055 = vmatpush1.bf16.msra.mxu0 %v997
      %1056 = vmatprep.subr.bf16.mxu0 0
      %1057 = vmatpush2.bf16.msra.mxu0 0
      %1058 = vmatprep.subr.bf16.mxu0 0
      %1059 = vmatpush2.bf16.msra.mxu0 0
      %1060 = vmatprep.subr.bf16.mxu0 0
      %1061 = vmatpush2.bf16.msra.mxu0 0
      %1062 = vmatprep.subr.bf16.mxu0 0
      %1063 = vmatpush2.bf16.msra.mxu0 0
      %1064 = vmatprep.subr.bf16.mxu0 0
      %1065 = vmatpush2.bf16.msra.mxu0 0
      %1066 = vmatprep.subr.bf16.mxu0 0
      %1067 = vmatpush2.bf16.msra.mxu0 0
      %1068 = vmatprep.subr.bf16.mxu0 0
      %1069 = vmatpush2.bf16.msra.mxu0 0
      %1070 = vmatprep.subr.bf16.mxu0 0
      %1071 = vmatpush2.bf16.msra.mxu0 0
      %1072 = vmatprep.mubr.bf16.mxu0 0
      %1073 = vmatmul.mubr.bf16.gmra.mxu0 %v988
      %v1074 = vpop.f32.mrf.mxu0
      %v1075 = vadd.f32 0.0, %v1074
      %v1076 = vpop.f32.mrf.mxu0
      %v1077 = vpop.f32.mrf.mxu0
      %v1078 = vpop.f32.mrf.mxu0
      %1079 = vdwg.mxu0
      %v1080 = vadd.f32 %v334, %v1034
      %v1081 = vadd.f32 %v335, %v1036
      %v1082 = vadd.f32 %v336, %v1075
      %1083 = vset.pattern.permute.xlu0 5
      %1084 = vperm.xlu0 %1083, %v354
      %v1085 = vpop.permute.xlu0 %1084
      %v1087 = vadd.f32 %v1080, %v1085
      %v1088 = vadd.f32 %v1081, %v1085
      %v1089 = vadd.f32 %v1082, %v1085
      %v1090 = vmul.f32 %v1087, %v342
      %v1091 = vmul.f32 %v1088, %v346
      %v1092 = vmul.f32 %v1089, %v350
      %v1093 = vadd.f32 %v1090, %v1091
      %v1094 = vadd.f32 %v1093, %v1092
      %1095 = vadd.xlane.f32.xlu0 %v1094
      %v1096 = vpop.xlane.xlu0 %1095
      %v1097 = vrot.slane %v1096, 4
      %v1098 = vadd.f32 %v1096, %v1097
      %v1099 = vrot.slane %v1098, 2
      %v1100 = vadd.f32 %v1098, %v1099
      %v1101 = vrot.slane %v1100, 1
      %v1102 = vadd.f32 %v1100, %v1101
      %s1103 = vtos %v1102
      %v1104 = vstv %s1103
      %v1105 = vmul.f32 %v1104, 0.00048828125
      %v1106 = vsub.f32 %v1090, %v1105
      %v1107 = vsub.f32 %v1091, %v1105
      %v1108 = vsub.f32 %v1092, %v1105
      %v1109 = vmul.f32 %v1106, %v342
      %v1110 = vmul.f32 %v1107, %v346
      %v1111 = vmul.f32 %v1108, %v350
      %v1112 = vmul.f32 %v1109, %v1109
      %v1113 = vmul.f32 %v1110, %v1110
      %v1114 = vmul.f32 %v1111, %v1111
      %v1115 = vadd.f32 %v1112, %v1113
      %v1116 = vadd.f32 %v1115, %v1114
      %1117 = vadd.xlane.f32.xlu0 %v1116
      %v1118 = vpop.xlane.xlu0 %1117
      %v1119 = vrot.slane %v1118, 4
      %v1120 = vadd.f32 %v1118, %v1119
      %v1121 = vrot.slane %v1120, 2
      %v1122 = vadd.f32 %v1120, %v1121
      %v1123 = vrot.slane %v1122, 1
      %v1124 = vadd.f32 %v1122, %v1123
      %s1125 = vtos %v1124
      %v1126 = vstv %s1125
      %v1127 = vmul.f32 %v1126, 0.0004885198
      %v1128 = vrsqrt.pop %v1127
      %v1129 = vmul.f32 %v1127, %v1128
      %vm1130 = vcmp.eq.f32.partialorder %v1127, inf
      %v1131 = vsel %vm1130, %v1127, %v1129
      %vm1132 = vcmp.eq.f32.partialorder %v1127, 0.0
      %v1133 = vand.u32 %v1127, 2147483648
      %v1134 = vsel %vm1132, %v1133, %v1131
      %v1135 = vadd.f32 %v1134, 1e-06
      %v1136 = vrcp.pop %v1135
      %v1137 = vmul.f32 1.0, %v1136
      %v1138 = vmul.f32 %v354, %v1137
      %1140 = vset.pattern.permute.xlu0 6
      %1141 = vperm.xlu0 %1140, %v1138
      %v1142 = vpop.permute.xlu0 %1141
      %v1144 = vmul.f32 %v1109, %v1142
      %v1145 = vmul.f32 %v1110, %v1142
      %v1146 = vmul.f32 %v1111, %v1142
      %1147 = vset.pattern.permute.xlu0 7
      %1148 = vperm.xlu0 %1147, %v354
      %v1149 = vpop.permute.xlu0 %1148
      %v1151 = vadd.f32 %v1144, %v1149
      %v1152 = vadd.f32 %v1145, %v1149
      %v1153 = vadd.f32 %v1146, %v1149
      %v1154 = vpack.c.bf16 %v1151, %v1151
      %v1155 = vpack.c.bf16 %v1152, %v1152
      %v1156 = vpack.c.bf16 %v1153, %v1153
      %v1157 = vld [vmem:[%s7] sm:$0xf]
      %v1158 = vld [vmem:[%s7 + $0x4] sm:$0xf]
      %1159 = vset.pattern.permute.xlu0 8
      %1160 = vperm.xlu0 %1159, %v354
      %v1161 = vpop.permute.xlu0 %1160
      %1163 = vset.pattern.permute.xlu0 8
      %1164 = vperm.xlu0 %1163, %v355
      %v1165 = vpop.permute.xlu0 %1164
      %v1169 = vunpack.c.l.b16 %v1157
      %v1170 = vunpack.c.l.b16 %v1158
      %v1171 = vpack.c.b16 %v1170, %v1169
      %v1173 = vsel %vm439, %v1171, 0
      %v1176 = vsel %vm443, %v1154, 0
      %v1179 = vsel %vm443, %v1155, 0
      %v1182 = vsel %vm443, %v1156, 0
      %1184 = vmatprep.subr.bf16.mxu0 0
      %1185 = vmatpush1.bf16.msra.mxu0 0
      %1186 = vmatprep.subr.bf16.mxu0 0
      %1187 = vmatpush1.bf16.msra.mxu0 0
      %1188 = vmatprep.subr.bf16.mxu0 0
      %1189 = vmatpush1.bf16.msra.mxu0 0
      %1190 = vmatprep.subr.bf16.mxu0 0
      %1191 = vmatpush1.bf16.msra.mxu0 0
      %1192 = vmatprep.subr.bf16.mxu0 0
      %1193 = vmatpush1.bf16.msra.mxu0 0
      %1194 = vmatprep.subr.bf16.mxu0 0
      %1195 = vmatpush1.bf16.msra.mxu0 0
      %1196 = vmatprep.subr.bf16.mxu0 0
      %1197 = vmatpush1.bf16.msra.mxu0 0
      %1198 = vmatprep.subr.bf16.mxu0 %v1179
      %1199 = vmatpush1.bf16.msra.mxu0 %v1176
      %1200 = vmatprep.subr.bf16.mxu0 0
      %1201 = vmatpush2.bf16.msra.mxu0 0
      %1202 = vmatprep.subr.bf16.mxu0 0
      %1203 = vmatpush2.bf16.msra.mxu0 0
      %1204 = vmatprep.subr.bf16.mxu0 0
      %1205 = vmatpush2.bf16.msra.mxu0 0
      %1206 = vmatprep.subr.bf16.mxu0 0
      %1207 = vmatpush2.bf16.msra.mxu0 0
      %1208 = vmatprep.subr.bf16.mxu0 0
      %1209 = vmatpush2.bf16.msra.mxu0 0
      %1210 = vmatprep.subr.bf16.mxu0 0
      %1211 = vmatpush2.bf16.msra.mxu0 0
      %1212 = vmatprep.subr.bf16.mxu0 0
      %1213 = vmatpush2.bf16.msra.mxu0 0
      %1214 = vmatprep.subr.bf16.mxu0 0
      %1215 = vmatpush2.bf16.msra.mxu0 0
      %1216 = vmatprep.mubr.bf16.mxu0 0
      %1217 = vmatmul.mubr.bf16.gmra.mxu0 %v1173
      %v1218 = vpop.f32.mrf.mxu0
      %v1219 = vadd.f32 %v1161, %v1218
      %v1220 = vpop.f32.mrf.mxu0
      %v1221 = vadd.f32 %v1161, %v1220
      %v1222 = vpop.f32.mrf.mxu0
      %v1223 = vadd.f32 %v1165, %v1222
      %v1224 = vpop.f32.mrf.mxu0
      %v1225 = vadd.f32 %v1165, %v1224
      %1226 = vdwg.mxu0
      %1227 = vmatprep.subr.bf16.mxu0 0
      %1228 = vmatpush1.bf16.msra.mxu0 0
      %1229 = vmatprep.subr.bf16.mxu0 0
      %1230 = vmatpush1.bf16.msra.mxu0 0
      %1231 = vmatprep.subr.bf16.mxu0 0
      %1232 = vmatpush1.bf16.msra.mxu0 0
      %1233 = vmatprep.subr.bf16.mxu0 0
      %1234 = vmatpush1.bf16.msra.mxu0 0
      %1235 = vmatprep.subr.bf16.mxu0 0
      %1236 = vmatpush1.bf16.msra.mxu0 0
      %1237 = vmatprep.subr.bf16.mxu0 0
      %1238 = vmatpush1.bf16.msra.mxu0 0
      %1239 = vmatprep.subr.bf16.mxu0 0
      %1240 = vmatpush1.bf16.msra.mxu0 0
      %1241 = vmatprep.subr.bf16.mxu0 0
      %1242 = vmatpush1.bf16.msra.mxu0 %v1182
      %1243 = vmatprep.subr.bf16.mxu0 0
      %1244 = vmatpush2.bf16.msra.mxu0 0
      %1245 = vmatprep.subr.bf16.mxu0 0
      %1246 = vmatpush2.bf16.msra.mxu0 0
      %1247 = vmatprep.subr.bf16.mxu0 0
      %1248 = vmatpush2.bf16.msra.mxu0 0
      %1249 = vmatprep.subr.bf16.mxu0 0
      %1250 = vmatpush2.bf16.msra.mxu0 0
      %1251 = vmatprep.subr.bf16.mxu0 0
      %1252 = vmatpush2.bf16.msra.mxu0 0
      %1253 = vmatprep.subr.bf16.mxu0 0
      %1254 = vmatpush2.bf16.msra.mxu0 0
      %1255 = vmatprep.subr.bf16.mxu0 0
      %1256 = vmatpush2.bf16.msra.mxu0 0
      %1257 = vmatprep.subr.bf16.mxu0 0
      %1258 = vmatpush2.bf16.msra.mxu0 0
      %1259 = vmatprep.mubr.bf16.mxu0 0
      %1260 = vmatmul.mubr.bf16.gmra.mxu0 %v1173
      %v1261 = vpop.f32.mrf.mxu0
      %v1262 = vadd.f32 %v1161, %v1261
      %v1263 = vpop.f32.mrf.mxu0
      %v1264 = vpop.f32.mrf.mxu0
      %v1265 = vadd.f32 %v1165, %v1264
      %v1266 = vpop.f32.mrf.mxu0
      %1267 = vdwg.mxu0
      %v1268 = vmul.f32 %v1219, %v1223
      %v1269 = vmul.f32 %v1221, %v1225
      %v1270 = vmul.f32 %v1262, %v1265
      %v1271 = vld [vmem:[%s8] sm:$0xf]
      %v1272 = vpack.c.bf16 %v1268, %v1268
      %v1273 = vpack.c.bf16 %v1269, %v1269
      %v1274 = vpack.c.bf16 %v1270, %v1270
      %v1276 = vsel %vm439, %v1271, 0
      %v1279 = vsel %vm443, %v1272, 0
      %v1282 = vsel %vm443, %v1273, 0
      %v1285 = vsel %vm443, %v1274, 0
      %1287 = vmatprep.subr.bf16.mxu0 0
      %1288 = vmatpush1.bf16.msra.mxu0 0
      %1289 = vmatprep.subr.bf16.mxu0 0
      %1290 = vmatpush1.bf16.msra.mxu0 0
      %1291 = vmatprep.subr.bf16.mxu0 0
      %1292 = vmatpush1.bf16.msra.mxu0 0
      %1293 = vmatprep.subr.bf16.mxu0 0
      %1294 = vmatpush1.bf16.msra.mxu0 0
      %1295 = vmatprep.subr.bf16.mxu0 0
      %1296 = vmatpush1.bf16.msra.mxu0 0
      %1297 = vmatprep.subr.bf16.mxu0 0
      %1298 = vmatpush1.bf16.msra.mxu0 0
      %1299 = vmatprep.subr.bf16.mxu0 0
      %1300 = vmatpush1.bf16.msra.mxu0 0
      %1301 = vmatprep.subr.bf16.mxu0 %v1282
      %1302 = vmatpush1.bf16.msra.mxu0 %v1279
      %1303 = vmatprep.subr.bf16.mxu0 0
      %1304 = vmatpush2.bf16.msra.mxu0 0
      %1305 = vmatprep.subr.bf16.mxu0 0
      %1306 = vmatpush2.bf16.msra.mxu0 0
      %1307 = vmatprep.subr.bf16.mxu0 0
      %1308 = vmatpush2.bf16.msra.mxu0 0
      %1309 = vmatprep.subr.bf16.mxu0 0
      %1310 = vmatpush2.bf16.msra.mxu0 0
      %1311 = vmatprep.subr.bf16.mxu0 0
      %1312 = vmatpush2.bf16.msra.mxu0 0
      %1313 = vmatprep.subr.bf16.mxu0 0
      %1314 = vmatpush2.bf16.msra.mxu0 0
      %1315 = vmatprep.subr.bf16.mxu0 0
      %1316 = vmatpush2.bf16.msra.mxu0 0
      %1317 = vmatprep.subr.bf16.mxu0 0
      %1318 = vmatpush2.bf16.msra.mxu0 0
      %1319 = vmatprep.mubr.bf16.mxu0 0
      %1320 = vmatmul.mubr.bf16.gmra.mxu0 %v1276
      %v1321 = vpop.f32.mrf.mxu0
      %v1322 = vadd.f32 0.0, %v1321
      %v1323 = vpop.f32.mrf.mxu0
      %v1324 = vadd.f32 0.0, %v1323
      %v1325 = vpop.f32.mrf.mxu0
      %v1326 = vpop.f32.mrf.mxu0
      %1327 = vdwg.mxu0
      %1328 = vmatprep.subr.bf16.mxu0 0
      %1329 = vmatpush1.bf16.msra.mxu0 0
      %1330 = vmatprep.subr.bf16.mxu0 0
      %1331 = vmatpush1.bf16.msra.mxu0 0
      %1332 = vmatprep.subr.bf16.mxu0 0
      %1333 = vmatpush1.bf16.msra.mxu0 0
      %1334 = vmatprep.subr.bf16.mxu0 0
      %1335 = vmatpush1.bf16.msra.mxu0 0
      %1336 = vmatprep.subr.bf16.mxu0 0
      %1337 = vmatpush1.bf16.msra.mxu0 0
      %1338 = vmatprep.subr.bf16.mxu0 0
      %1339 = vmatpush1.bf16.msra.mxu0 0
      %1340 = vmatprep.subr.bf16.mxu0 0
      %1341 = vmatpush1.bf16.msra.mxu0 0
      %1342 = vmatprep.subr.bf16.mxu0 0
      %1343 = vmatpush1.bf16.msra.mxu0 %v1285
      %1344 = vmatprep.subr.bf16.mxu0 0
      %1345 = vmatpush2.bf16.msra.mxu0 0
      %1346 = vmatprep.subr.bf16.mxu0 0
      %1347 = vmatpush2.bf16.msra.mxu0 0
      %1348 = vmatprep.subr.bf16.mxu0 0
      %1349 = vmatpush2.bf16.msra.mxu0 0
      %1350 = vmatprep.subr.bf16.mxu0 0
      %1351 = vmatpush2.bf16.msra.mxu0 0
      %1352 = vmatprep.subr.bf16.mxu0 0
      %1353 = vmatpush2.bf16.msra.mxu0 0
      %1354 = vmatprep.subr.bf16.mxu0 0
      %1355 = vmatpush2.bf16.msra.mxu0 0
      %1356 = vmatprep.subr.bf16.mxu0 0
      %1357 = vmatpush2.bf16.msra.mxu0 0
      %1358 = vmatprep.subr.bf16.mxu0 0
      %1359 = vmatpush2.bf16.msra.mxu0 0
      %1360 = vmatprep.mubr.bf16.mxu0 0
      %1361 = vmatmul.mubr.bf16.gmra.mxu0 %v1276
      %v1362 = vpop.f32.mrf.mxu0
      %v1363 = vadd.f32 0.0, %v1362
      %v1364 = vpop.f32.mrf.mxu0
      %v1365 = vpop.f32.mrf.mxu0
      %v1366 = vpop.f32.mrf.mxu0
      %1367 = vdwg.mxu0
      %v1368 = vadd.f32 %v1090, %v1322
      %v1369 = vadd.f32 %v1091, %v1324
      %v1370 = vadd.f32 %v1092, %v1363
      %1371 = vset.pattern.permute.xlu0 9
      %1372 = vperm.xlu0 %1371, %v354
      %v1373 = vpop.permute.xlu0 %1372
      %v1375 = vadd.f32 %v1368, %v1373
      %v1376 = vadd.f32 %v1369, %v1373
      %v1377 = vadd.f32 %v1370, %v1373
      %1378 = vst [vmem:[%s332] sm:$0xff] %v1375
      %1379 = vst [vmem:[%s332 + $0x8] sm:$0xff] %v1376
      %1380 = vst [vmem:[%s332 + $0x10] sm:$0xff] %v1377
      %p1381 = scmp.lt.s32.totalorder %s20, 1
      %s1382 = scalar_select %p1381, %s20, 1
      %s1383 = smul.addr %s1382, 3
      %s1384 = smul.addr %s1383, 8
      %s1385 = scalar_lea.vmem %s9, %s1384
      // Predicated region
      $region57: #{drm_forward.1} parent=55 // pred_check
        %p1386 = pneg %p232
      $region58: #{drm_forward.1} parent=55 // pred_check_branch
        %1388 = sbr.rel (%p1386) target = $region60
      $region59: #{drm_forward.1} parent=55 // pred_region
        _
      $region60: #{drm_forward.1} parent=55 // pred_fallthru
        _
    $region56: #{drm_forward.1} parent=5 // pred_fallthru
      _
    %p1389 = scmp.le.s32.totalorder 2, %s15
    // Predicated region
    $region61: #{drm_forward.1} parent=5 // pred_check
      %p1390 = pneg %p1389
    $region62: #{drm_forward.1} parent=5 // pred_check_branch
      %1392 = sbr.rel (%p1390) target = $region64
    $region63: #{drm_forward.1} parent=5 // pred_region
      %s1393 = ssub.s32 %s15, 2
      // Predicated region
      $region65: #{drm_forward.1} parent=63 // pred_check
        %p1394 = pneg %p238
      $region66: #{drm_forward.1} parent=63 // pred_check_branch
        %1396 = sbr.rel (%p1394) target = $region68
      $region67: #{drm_forward.1} parent=63 // pred_region
        %p1397 = scmp.lt.s32.totalorder %s21, 1
        %s1398 = scalar_select %p1397, %s21, 1
        %s1399 = smul.addr %s1398, 3
        %s1400 = smul.addr %s1399, 8
        %s1401 = scalar_lea.vmem %s9, %s1400
      $region68: #{drm_forward.1} parent=63 // pred_fallthru
        _
    $region64: #{drm_forward.1} parent=5 // pred_fallthru
      _
  $region6: #{drm_forward.1} parent=0 // loop_footer
    %s19 = sadd.s32 1, %s15
  $region7: #{drm_forward.1} parent=0 // loop_footer_branch
    %14 = sbr.rel target = $region3
  $region8: #{drm_forward.1} parent=0 // loop_exit
    _

</llo_original>
